<compile_context>
chip_gen: v7x
topology: tpu7x:2x2x1
jax: 0.10.0
libtpu: 0.0.40
codegen_flags: <defaults>
</compile_context>

<pallas_src>
from functools import partial

import jax
import jax.numpy as jnp
from jax import lax
from jax.experimental import pallas as pl
from jax.experimental.pallas import tpu as pltpu

UPDATE_LR = 0.1        # args.update_lr
NUM_INNER_STEPS = 2    # args.num_inner_steps
LANE = 128             # TPU lane width; class dim is padded up to a multiple of this
SUBLANE = 8            # f32 sublane tile


def fused_meta_kernel(x_traj_ref, x_rand_ref, y_traj_ref, y_rand_ref,
                      we_ref, be_ref, w_ref, b_ref,
                      logits_ref, loss_ref, corr_ref,
                      *, update_lr, num_inner_steps, batch, num_classes):
    """One meta-task: rep matmuls once, S+1 inner SGD steps on the head, meta loss/accuracy.
    Fast weights live entirely in VMEM/vregs."""
    B = batch
    C_pad = w_ref.shape[1]
    neg = jnp.float32(-1e30)                 # finite "minus infinity" (avoids 0 * -inf = NaN)
    inv_b = jnp.float32(1.0 / B)

    # --- frozen representation net (RLN): each distinct image batch exactly once ---
    # x arrives f32; cast to bf16 in-kernel for MXU operands, accumulate in f32.
    we = we_ref[...]                                              # (D, R) bf16 (persistent)
    be = be_ref[...]                                              # (1, R) f32
    rep_traj = jnp.maximum(
        jnp.dot(x_traj_ref[...].astype(jnp.bfloat16), we,
                preferred_element_type=jnp.float32) + be, 0.0)    # (S*B, R) f32
    rep_rand = jnp.maximum(
        jnp.dot(x_rand_ref[...].astype(jnp.bfloat16), we,
                preferred_element_type=jnp.float32) + be, 0.0)    # (B, R) f32

    col = lax.broadcasted_iota(jnp.int32, (B, C_pad), 1)
    valid = col < num_classes                # mask for padded class columns

    y_traj = y_traj_ref[...]                 # (S, B, 1) int32
    w = w_ref[...]                           # (R, C_pad) f32 fast weights
    b = b_ref[...]                           # (1, C_pad) f32

    def sgd_step(rep_f32, y, w, b):
        # Adaptable classifier head (PLN): bf16 MXU operands, f32 accumulation; all
        # elementwise/softmax math stays f32 (v5e has no bf16 VPU/EUP).
        rep16 = rep_f32.astype(jnp.bfloat16)
        logits = jnp.dot(rep16, w.astype(jnp.bfloat16),
                         preferred_element_type=jnp.float32) + b
        logits = jnp.where(valid, logits, neg)
        z = logits - jnp.max(logits, axis=1, keepdims=True)
        ez = jnp.exp(z)
        # exact reciprocal: p feeds dw/db (gradients), keep it tight.
        p = ez * pl.reciprocal(jnp.sum(ez, axis=1, keepdims=True), approx=False)
        onehot = (col == y).astype(jnp.float32)
        g = (p - onehot) * inv_b             # dL/dlogits for mean-reduced cross entropy
        # dw = rep^T @ g without materializing the transpose: contract the batch axis.
        dw = lax.dot_general(rep16, g.astype(jnp.bfloat16),
                             (((0,), (0,)), ((), ())),
                             preferred_element_type=jnp.float32)
        db = jnp.sum(g, axis=0, keepdims=True)
        # fast_weights = w - update_lr * grad  (only the learnable head adapts), kept f32.
        return w - update_lr * dw, b - update_lr * db

    # PyTorch step order: inner_update(x_traj[0]) then k = 0..S-1 (x_traj[0] reused),
    # i.e. S+1 SGD steps on data indices [0, 0, 1, ..., S-1]; rep is reused, not recomputed.
    for idx in [0] + list(range(num_inner_steps)):
        rep = rep_traj[idx * B:(idx + 1) * B, :]    # (8,128)-tile-aligned static slice
        w, b = sgd_step(rep, y_traj[idx], w, b)

    # --- meta loss + accuracy on x_rand with the fast weights ---
    yq = y_rand_ref[...]                     # (B, 1) int32
    logits = jnp.dot(rep_rand.astype(jnp.bfloat16), w.astype(jnp.bfloat16),
                     preferred_element_type=jnp.float32) + b
    logits = jnp.where(valid, logits, neg)

    z = logits - jnp.max(logits, axis=1, keepdims=True)
    lse = jnp.log(jnp.sum(jnp.exp(z), axis=1, keepdims=True))
    logp = z - lse
    onehot = (col == yq).astype(jnp.float32)
    loss = -jnp.sum(onehot * logp) * inv_b

    # argmax(softmax(logits)) == argmax(logits); first-max tie-break via min index.
    mx = jnp.max(logits, axis=1, keepdims=True)
    pred = jnp.min(jnp.where(logits == mx, col, C_pad), axis=1, keepdims=True)
    correct = jnp.sum((pred == yq).astype(jnp.float32))

    logits_ref[...] = logits
    # Full (8,128) lane-dense unmasked stores (no iota/where packing); wrapper reads [t,0,0].
    loss_ref[...] = jnp.broadcast_to(loss, loss_ref.shape)
    corr_ref[...] = jnp.broadcast_to(correct, corr_ref.shape)


def _round_up(x, m):
    return (x + m - 1) // m * m


@jax.jit
def meta_forward(x_traj, y_traj, x_rand, y_rand, we, be, w, b):
    """Task-batched MetaLearingClassification.forward.

    Shapes (leading T = independent meta-tasks; T=1 reproduces the PyTorch call exactly):
      x_traj (T, S, B, C, H, W)   y_traj (T, S, B)
      x_rand (T, 1, B, C, H, W)   y_rand (T, 1, B)
    Returns per-task (accuracy (T,), meta_loss (T,), logits (T, B, NC)).
    """
    T, S, B = x_traj.shape[:3]
    D, R = we.shape
    NC = w.shape[1]
    C_pad = _round_up(NC, LANE)
    assert B % SUBLANE == 0, "batch must be a multiple of 8 (f32 sublane tile)"
    assert D % LANE == 0 and R % LANE == 0

    # Pure row-major reshapes: no concatenate -> no extra HBM copy of the images.
    x_traj_f = x_traj.reshape(T, S * B, D)
    x_rand_f = x_rand.reshape(T, B, D)

    # `we` is stored bf16 once at parameter init; this astype is then a no-op (elided).
    we_b = we.astype(jnp.bfloat16)

    # Pad the class dim to lane width so logits / w / softmax reductions are lane-dense.
    w_p = jnp.pad(w.astype(jnp.float32), ((0, 0), (0, C_pad - NC)))
    b_p = jnp.pad(b.astype(jnp.float32), ((0, 0), (0, C_pad - NC)))

    y_traj_v = y_traj.astype(jnp.int32).reshape(T, S, B, 1)
    y_rand_v = y_rand.astype(jnp.int32).reshape(T, B, 1)

    M = (S + 1) * B
    n_head_mm = 2 * (S + 1) + 1
    cost = pl.CostEstimate(
        flops=T * (2 * M * D * R + n_head_mm * 2 * B * R * C_pad),
        transcendentals=T * (S + 2) * B * C_pad,
        bytes_accessed=(x_traj_f.size * 4 + x_rand_f.size * 4 + we_b.size * 2
                        + (w_p.size + b_p.size + be.size) * 4
                        + (y_traj_v.size + y_rand_v.size) * 4
                        + T * (B * C_pad + 2 * SUBLANE * LANE) * 4),
    )

    grid_spec = pltpu.PrefetchScalarGridSpec(
        num_scalar_prefetch=0,
        grid=(T,),   # independent meta-tasks -> megacore-parallel (uses both TCs on v7x)
        in_specs=[
            pl.BlockSpec((None, S * B, D), lambda t: (t, 0, 0)),    # x_traj (per task)
            pl.BlockSpec((None, B, D), lambda t: (t, 0, 0)),        # x_rand (per task)
            pl.BlockSpec((None, S, B, 1), lambda t: (t, 0, 0, 0)),  # y_traj (per task)
            pl.BlockSpec((None, B, 1), lambda t: (t, 0, 0)),        # y_rand (per task)
            # Constant block index -> weights DMA'd once, VMEM-resident across all tasks.
            pl.BlockSpec((D, R), lambda t: (0, 0)),                 # we (bf16, frozen RLN)
            pl.BlockSpec((1, R), lambda t: (0, 0)),                 # be
            pl.BlockSpec((R, C_pad), lambda t: (0, 0)),             # w  (head init)
            pl.BlockSpec((1, C_pad), lambda t: (0, 0)),             # b  (head init)
        ],
        out_specs=(
            pl.BlockSpec((None, B, C_pad), lambda t: (t, 0, 0)),       # logits
            pl.BlockSpec((None, SUBLANE, LANE), lambda t: (t, 0, 0)),  # meta loss
            pl.BlockSpec((None, SUBLANE, LANE), lambda t: (t, 0, 0)),  # correct count
        ),
    )

    # TODO(synk): if D*R grows to realistic OML RLN sizes, K-tile the rep matmul with an
    # "arbitrary" grid axis + f32 scratch accumulator and set vmem_limit_bytes (v7x: 64 MiB).
    logits_p, loss_t, corr_t = pl.pallas_call(
        partial(fused_meta_kernel, update_lr=UPDATE_LR, num_inner_steps=S,
                batch=B, num_classes=NC),
        out_shape=(jax.ShapeDtypeStruct((T, B, C_pad), jnp.float32),
                   jax.ShapeDtypeStruct((T, SUBLANE, LANE), jnp.float32),
                   jax.ShapeDtypeStruct((T, SUBLANE, LANE), jnp.float32)),
        grid_spec=grid_spec,
        compiler_params=pltpu.CompilerParams(dimension_semantics=("parallel",)),
        cost_estimate=cost,
    )(x_traj_f, x_rand_f, y_traj_v, y_rand_v, we_b, be, w_p, b_p)

    meta_loss = loss_t[:, 0, 0]
    accuracy = corr_t[:, 0, 0] / B
    return accuracy, meta_loss, logits_p[:, :, :NC]


if __name__ == "__main__":
    key = jax.random.PRNGKey(0)
    T = 2                                   # two independent meta-tasks (parallel grid)
    S = NUM_INNER_STEPS
    B, C_img, H, W = 8, 4, 16, 16           # images (NCHW)
    D = C_img * H * W                       # 1024 flattened features
    R = 128                                 # representation size
    NC = 16                                 # number of classes

    k1, k2, k3, k4, k5, k6 = jax.random.split(key, 6)
    x_traj = jax.random.normal(k1, (T, S, B, C_img, H, W), jnp.float32)
    y_traj = jax.random.randint(k2, (T, S, B), 0, NC, dtype=jnp.int32)
    x_rand = jax.random.normal(k3, (T, 1, B, C_img, H, W), jnp.float32)
    y_rand = jax.random.randint(k4, (T, 1, B), 0, NC, dtype=jnp.int32)

    # deterministic parameter init (kaiming-style scaling); the frozen RLN weight is
    # stored bf16 ONCE here -> no per-call wrapper cast / extra HBM round-trip.
    we = (jax.random.normal(k5, (D, R), jnp.float32) * (2.0 / D) ** 0.5).astype(jnp.bfloat16)
    be = jnp.zeros((1, R), jnp.float32)
    w = jax.random.normal(k6, (R, NC), jnp.float32) * (2.0 / R) ** 0.5
    b = jnp.zeros((1, NC), jnp.float32)

    acc, loss, logits = meta_forward(x_traj, y_traj, x_rand, y_rand, we, be, w, b)
    jax.block_until_ready((acc, loss, logits))
    assert logits.shape == (T, B, NC)
    assert bool(jnp.all(jnp.isfinite(loss)))
    assert bool(jnp.all((acc >= 0.0) & (acc <= 1.0)))
    print("KERNEL_OK")
</pallas_src>

<mosaic_0001>
module attributes {stable_mosaic.version = 11 : i64} {
  func.func @fused_meta_kernel(%arg0: i32, %arg1: memref<1x16x1024xf32, #tpu.memory_space<vmem>>, %arg2: memref<1x8x1024xf32, #tpu.memory_space<vmem>>, %arg3: memref<1x2x8x1xi32, #tpu.memory_space<vmem>>, %arg4: memref<1x8x1xi32, #tpu.memory_space<vmem>>, %arg5: memref<1024x128xbf16, #tpu.memory_space<vmem>>, %arg6: memref<1x128xf32, #tpu.memory_space<vmem>>, %arg7: memref<128x128xf32, #tpu.memory_space<vmem>>, %arg8: memref<1x128xf32, #tpu.memory_space<vmem>>, %arg9: memref<1x8x128xf32, #tpu.memory_space<vmem>>, %arg10: memref<1x8x128xf32, #tpu.memory_space<vmem>>, %arg11: memref<1x8x128xf32, #tpu.memory_space<vmem>>) attributes {dimension_semantics = [#tpu.dimension_semantics<parallel>], iteration_bounds = array<i64: 2>, scalar_prefetch = 0 : i64, scratch_operands = 0 : i64, tpu.core_type = #tpu.core_type<tc>, window_params = [{transform_indices = @transform_0, window_bounds = array<i64: 1, 16, 1024>}, {transform_indices = @transform_1, window_bounds = array<i64: 1, 8, 1024>}, {transform_indices = @transform_2, window_bounds = array<i64: 1, 2, 8, 1>}, {transform_indices = @transform_3, window_bounds = array<i64: 1, 8, 1>}, {pipeline_mode = #tpu.pipeline_mode<synchronous>, transform_indices = @transform_4, window_bounds = array<i64: 1024, 128>}, {pipeline_mode = #tpu.pipeline_mode<synchronous>, transform_indices = @transform_5, window_bounds = array<i64: 1, 128>}, {pipeline_mode = #tpu.pipeline_mode<synchronous>, transform_indices = @transform_6, window_bounds = array<i64: 128, 128>}, {pipeline_mode = #tpu.pipeline_mode<synchronous>, transform_indices = @transform_7, window_bounds = array<i64: 1, 128>}, {transform_indices = @transform_8, window_bounds = array<i64: 1, 8, 128>}, {transform_indices = @transform_9, window_bounds = array<i64: 1, 8, 128>}, {transform_indices = @transform_10, window_bounds = array<i64: 1, 8, 128>}]} {
    %c0 = arith.constant 0 : index
    %c0_0 = arith.constant 0 : index
    %0 = vector.load %arg5[%c0, %c0_0] : memref<1024x128xbf16, #tpu.memory_space<vmem>>, vector<1024x128xbf16>
    %c0_1 = arith.constant 0 : index
    %c0_2 = arith.constant 0 : index
    %1 = vector.load %arg6[%c0_1, %c0_2] : memref<1x128xf32, #tpu.memory_space<vmem>>, vector<1x128xf32>
    %c0_3 = arith.constant 0 : index
    %c0_4 = arith.constant 0 : index
    %c0_5 = arith.constant 0 : index
    %2 = vector.load %arg1[%c0_3, %c0_4, %c0_5] : memref<1x16x1024xf32, #tpu.memory_space<vmem>>, vector<1x16x1024xf32>
    %3 = vector.shape_cast %2 : vector<1x16x1024xf32> to vector<16x1024xf32>
    %4 = arith.truncf %3 : vector<16x1024xf32> to vector<16x1024xbf16>
    %cst = arith.constant dense<0.000000e+00> : vector<16x128xf32>
    %5 = tpu.matmul %4, %0, %cst {dimension_numbers = #tpu.dot_dimension_numbers<[1], [0], [0], [1], [0, 0, 1, 1], [], []>} : vector<16x1024xbf16>, vector<1024x128xbf16>, vector<16x128xf32> -> vector<16x128xf32>
    %6 = vector.broadcast %1 : vector<1x128xf32> to vector<16x128xf32>
    %7 = arith.addf %5, %6 : vector<16x128xf32>
    %cst_6 = arith.constant 0.000000e+00 : f32
    %8 = vector.broadcast %cst_6 : f32 to vector<16x128xf32>
    %9 = arith.maximumf %7, %8 : vector<16x128xf32>
    %c0_7 = arith.constant 0 : index
    %c0_8 = arith.constant 0 : index
    %c0_9 = arith.constant 0 : index
    %10 = vector.load %arg2[%c0_7, %c0_8, %c0_9] : memref<1x8x1024xf32, #tpu.memory_space<vmem>>, vector<1x8x1024xf32>
    %11 = vector.shape_cast %10 : vector<1x8x1024xf32> to vector<8x1024xf32>
    %12 = arith.truncf %11 : vector<8x1024xf32> to vector<8x1024xbf16>
    %cst_10 = arith.constant dense<0.000000e+00> : vector<8x128xf32>
    %13 = tpu.matmul %12, %0, %cst_10 {dimension_numbers = #tpu.dot_dimension_numbers<[1], [0], [0], [1], [0, 0, 1, 1], [], []>} : vector<8x1024xbf16>, vector<1024x128xbf16>, vector<8x128xf32> -> vector<8x128xf32>
    %14 = vector.broadcast %1 : vector<1x128xf32> to vector<8x128xf32>
    %15 = arith.addf %13, %14 : vector<8x128xf32>
    %cst_11 = arith.constant 0.000000e+00 : f32
    %16 = vector.broadcast %cst_11 : f32 to vector<8x128xf32>
    %17 = arith.maximumf %15, %16 : vector<8x128xf32>
    %18 = tpu.iota {dimensions = array<i32: 1>} : vector<8x128xi32>
    %c16_i32 = arith.constant 16 : i32
    %19 = vector.broadcast %c16_i32 : i32 to vector<8x128xi32>
    %20 = arith.cmpi slt, %18, %19 : vector<8x128xi32>
    %c0_12 = arith.constant 0 : index
    %c0_13 = arith.constant 0 : index
    %c0_14 = arith.constant 0 : index
    %c0_15 = arith.constant 0 : index
    %21 = vector.load %arg3[%c0_12, %c0_13, %c0_14, %c0_15] : memref<1x2x8x1xi32, #tpu.memory_space<vmem>>, vector<1x2x8x1xi32>
    %22 = vector.shape_cast %21 : vector<1x2x8x1xi32> to vector<2x8x1xi32>
    %c0_16 = arith.constant 0 : index
    %c0_17 = arith.constant 0 : index
    %23 = vector.load %arg7[%c0_16, %c0_17] : memref<128x128xf32, #tpu.memory_space<vmem>>, vector<128x128xf32>
    %c0_18 = arith.constant 0 : index
    %c0_19 = arith.constant 0 : index
    %24 = vector.load %arg8[%c0_18, %c0_19] : memref<1x128xf32, #tpu.memory_space<vmem>>, vector<1x128xf32>
    %25 = vector.extract_strided_slice %9 {offsets = [0, 0], sizes = [8, 128], strides = [1, 1]} : vector<16x128xf32> to vector<8x128xf32>
    %26 = vector.extract_strided_slice %22 {offsets = [0, 0, 0], sizes = [1, 8, 1], strides = [1, 1, 1]} : vector<2x8x1xi32> to vector<1x8x1xi32>
    %27 = vector.shape_cast %26 : vector<1x8x1xi32> to vector<8x1xi32>
    %28 = arith.truncf %25 : vector<8x128xf32> to vector<8x128xbf16>
    %29 = arith.truncf %23 : vector<128x128xf32> to vector<128x128xbf16>
    %cst_20 = arith.constant dense<0.000000e+00> : vector<8x128xf32>
    %30 = tpu.matmul %28, %29, %cst_20 {dimension_numbers = #tpu.dot_dimension_numbers<[1], [0], [0], [1], [0, 0, 1, 1], [], []>} : vector<8x128xbf16>, vector<128x128xbf16>, vector<8x128xf32> -> vector<8x128xf32>
    %31 = vector.broadcast %24 : vector<1x128xf32> to vector<8x128xf32>
    %32 = arith.addf %30, %31 : vector<8x128xf32>
    %cst_21 = arith.constant -1.000000e+30 : f32
    %33 = vector.broadcast %cst_21 : f32 to vector<8x128xf32>
    %34 = arith.select %20, %32, %33 : vector<8x128xi1>, vector<8x128xf32>
    %cst_22 = arith.constant dense<0xFF800000> : vector<8xf32>
    %35 = vector.multi_reduction <maximumf>, %34, %cst_22 [1] : vector<8x128xf32> to vector<8xf32>
    %36 = vector.shape_cast %35 : vector<8xf32> to vector<8x1xf32>
    %37 = vector.broadcast %36 : vector<8x1xf32> to vector<8x128xf32>
    %38 = arith.subf %34, %37 : vector<8x128xf32>
    %39 = math.exp %38 : vector<8x128xf32>
    %cst_23 = arith.constant dense<0.000000e+00> : vector<8xf32>
    %40 = vector.multi_reduction <add>, %39, %cst_23 [1] : vector<8x128xf32> to vector<8xf32>
    %41 = vector.shape_cast %40 : vector<8xf32> to vector<8x1xf32>
    %42 = tpu.reciprocal %41 : vector<8x1xf32> -> vector<8x1xf32>
    %43 = vector.broadcast %42 : vector<8x1xf32> to vector<8x128xf32>
    %44 = arith.mulf %39, %43 : vector<8x128xf32>
    %45 = vector.broadcast %27 : vector<8x1xi32> to vector<8x128xi32>
    %46 = arith.cmpi eq, %18, %45 : vector<8x128xi32>
    %47 = arith.extui %46 : vector<8x128xi1> to vector<8x128xi32>
    %48 = arith.sitofp %47 : vector<8x128xi32> to vector<8x128xf32>
    %49 = arith.subf %44, %48 : vector<8x128xf32>
    %cst_24 = arith.constant 1.250000e-01 : f32
    %50 = vector.broadcast %cst_24 : f32 to vector<8x128xf32>
    %51 = arith.mulf %49, %50 : vector<8x128xf32>
    %52 = arith.truncf %51 : vector<8x128xf32> to vector<8x128xbf16>
    %cst_25 = arith.constant dense<0.000000e+00> : vector<128x128xf32>
    %53 = tpu.matmul %28, %52, %cst_25 {dimension_numbers = #tpu.dot_dimension_numbers<[0], [0], [1], [1], [0, 1, 1, 1], [], []>} : vector<8x128xbf16>, vector<8x128xbf16>, vector<128x128xf32> -> vector<128x128xf32>
    %cst_26 = arith.constant dense<0.000000e+00> : vector<128xf32>
    %54 = vector.multi_reduction <add>, %51, %cst_26 [0] : vector<8x128xf32> to vector<128xf32>
    %55 = vector.shape_cast %54 : vector<128xf32> to vector<1x128xf32>
    %cst_27 = arith.constant 1.000000e-01 : f32
    %56 = vector.broadcast %cst_27 : f32 to vector<128x128xf32>
    %57 = arith.mulf %56, %53 : vector<128x128xf32>
    %58 = arith.subf %23, %57 : vector<128x128xf32>
    %cst_28 = arith.constant 1.000000e-01 : f32
    %59 = vector.broadcast %cst_28 : f32 to vector<1x128xf32>
    %60 = arith.mulf %59, %55 : vector<1x128xf32>
    %61 = arith.subf %24, %60 : vector<1x128xf32>
    %62 = vector.extract_strided_slice %9 {offsets = [0, 0], sizes = [8, 128], strides = [1, 1]} : vector<16x128xf32> to vector<8x128xf32>
    %63 = vector.extract_strided_slice %22 {offsets = [0, 0, 0], sizes = [1, 8, 1], strides = [1, 1, 1]} : vector<2x8x1xi32> to vector<1x8x1xi32>
    %64 = vector.shape_cast %63 : vector<1x8x1xi32> to vector<8x1xi32>
    %65 = arith.truncf %62 : vector<8x128xf32> to vector<8x128xbf16>
    %66 = arith.truncf %58 : vector<128x128xf32> to vector<128x128xbf16>
    %cst_29 = arith.constant dense<0.000000e+00> : vector<8x128xf32>
    %67 = tpu.matmul %65, %66, %cst_29 {dimension_numbers = #tpu.dot_dimension_numbers<[1], [0], [0], [1], [0, 0, 1, 1], [], []>} : vector<8x128xbf16>, vector<128x128xbf16>, vector<8x128xf32> -> vector<8x128xf32>
    %68 = vector.broadcast %61 : vector<1x128xf32> to vector<8x128xf32>
    %69 = arith.addf %67, %68 : vector<8x128xf32>
    %cst_30 = arith.constant -1.000000e+30 : f32
    %70 = vector.broadcast %cst_30 : f32 to vector<8x128xf32>
    %71 = arith.select %20, %69, %70 : vector<8x128xi1>, vector<8x128xf32>
    %cst_31 = arith.constant dense<0xFF800000> : vector<8xf32>
    %72 = vector.multi_reduction <maximumf>, %71, %cst_31 [1] : vector<8x128xf32> to vector<8xf32>
    %73 = vector.shape_cast %72 : vector<8xf32> to vector<8x1xf32>
    %74 = vector.broadcast %73 : vector<8x1xf32> to vector<8x128xf32>
    %75 = arith.subf %71, %74 : vector<8x128xf32>
    %76 = math.exp %75 : vector<8x128xf32>
    %cst_32 = arith.constant dense<0.000000e+00> : vector<8xf32>
    %77 = vector.multi_reduction <add>, %76, %cst_32 [1] : vector<8x128xf32> to vector<8xf32>
    %78 = vector.shape_cast %77 : vector<8xf32> to vector<8x1xf32>
    %79 = tpu.reciprocal %78 : vector<8x1xf32> -> vector<8x1xf32>
    %80 = vector.broadcast %79 : vector<8x1xf32> to vector<8x128xf32>
    %81 = arith.mulf %76, %80 : vector<8x128xf32>
    %82 = vector.broadcast %64 : vector<8x1xi32> to vector<8x128xi32>
    %83 = arith.cmpi eq, %18, %82 : vector<8x128xi32>
    %84 = arith.extui %83 : vector<8x128xi1> to vector<8x128xi32>
    %85 = arith.sitofp %84 : vector<8x128xi32> to vector<8x128xf32>
    %86 = arith.subf %81, %85 : vector<8x128xf32>
    %cst_33 = arith.constant 1.250000e-01 : f32
    %87 = vector.broadcast %cst_33 : f32 to vector<8x128xf32>
    %88 = arith.mulf %86, %87 : vector<8x128xf32>
    %89 = arith.truncf %88 : vector<8x128xf32> to vector<8x128xbf16>
    %cst_34 = arith.constant dense<0.000000e+00> : vector<128x128xf32>
    %90 = tpu.matmul %65, %89, %cst_34 {dimension_numbers = #tpu.dot_dimension_numbers<[0], [0], [1], [1], [0, 1, 1, 1], [], []>} : vector<8x128xbf16>, vector<8x128xbf16>, vector<128x128xf32> -> vector<128x128xf32>
    %cst_35 = arith.constant dense<0.000000e+00> : vector<128xf32>
    %91 = vector.multi_reduction <add>, %88, %cst_35 [0] : vector<8x128xf32> to vector<128xf32>
    %92 = vector.shape_cast %91 : vector<128xf32> to vector<1x128xf32>
    %cst_36 = arith.constant 1.000000e-01 : f32
    %93 = vector.broadcast %cst_36 : f32 to vector<128x128xf32>
    %94 = arith.mulf %93, %90 : vector<128x128xf32>
    %95 = arith.subf %58, %94 : vector<128x128xf32>
    %cst_37 = arith.constant 1.000000e-01 : f32
    %96 = vector.broadcast %cst_37 : f32 to vector<1x128xf32>
    %97 = arith.mulf %96, %92 : vector<1x128xf32>
    %98 = arith.subf %61, %97 : vector<1x128xf32>
    %99 = vector.extract_strided_slice %9 {offsets = [8, 0], sizes = [8, 128], strides = [1, 1]} : vector<16x128xf32> to vector<8x128xf32>
    %100 = vector.extract_strided_slice %22 {offsets = [1, 0, 0], sizes = [1, 8, 1], strides = [1, 1, 1]} : vector<2x8x1xi32> to vector<1x8x1xi32>
    %101 = vector.shape_cast %100 : vector<1x8x1xi32> to vector<8x1xi32>
    %102 = arith.truncf %99 : vector<8x128xf32> to vector<8x128xbf16>
    %103 = arith.truncf %95 : vector<128x128xf32> to vector<128x128xbf16>
    %cst_38 = arith.constant dense<0.000000e+00> : vector<8x128xf32>
    %104 = tpu.matmul %102, %103, %cst_38 {dimension_numbers = #tpu.dot_dimension_numbers<[1], [0], [0], [1], [0, 0, 1, 1], [], []>} : vector<8x128xbf16>, vector<128x128xbf16>, vector<8x128xf32> -> vector<8x128xf32>
    %105 = vector.broadcast %98 : vector<1x128xf32> to vector<8x128xf32>
    %106 = arith.addf %104, %105 : vector<8x128xf32>
    %cst_39 = arith.constant -1.000000e+30 : f32
    %107 = vector.broadcast %cst_39 : f32 to vector<8x128xf32>
    %108 = arith.select %20, %106, %107 : vector<8x128xi1>, vector<8x128xf32>
    %cst_40 = arith.constant dense<0xFF800000> : vector<8xf32>
    %109 = vector.multi_reduction <maximumf>, %108, %cst_40 [1] : vector<8x128xf32> to vector<8xf32>
    %110 = vector.shape_cast %109 : vector<8xf32> to vector<8x1xf32>
    %111 = vector.broadcast %110 : vector<8x1xf32> to vector<8x128xf32>
    %112 = arith.subf %108, %111 : vector<8x128xf32>
    %113 = math.exp %112 : vector<8x128xf32>
    %cst_41 = arith.constant dense<0.000000e+00> : vector<8xf32>
    %114 = vector.multi_reduction <add>, %113, %cst_41 [1] : vector<8x128xf32> to vector<8xf32>
    %115 = vector.shape_cast %114 : vector<8xf32> to vector<8x1xf32>
    %116 = tpu.reciprocal %115 : vector<8x1xf32> -> vector<8x1xf32>
    %117 = vector.broadcast %116 : vector<8x1xf32> to vector<8x128xf32>
    %118 = arith.mulf %113, %117 : vector<8x128xf32>
    %119 = vector.broadcast %101 : vector<8x1xi32> to vector<8x128xi32>
    %120 = arith.cmpi eq, %18, %119 : vector<8x128xi32>
    %121 = arith.extui %120 : vector<8x128xi1> to vector<8x128xi32>
    %122 = arith.sitofp %121 : vector<8x128xi32> to vector<8x128xf32>
    %123 = arith.subf %118, %122 : vector<8x128xf32>
    %cst_42 = arith.constant 1.250000e-01 : f32
    %124 = vector.broadcast %cst_42 : f32 to vector<8x128xf32>
    %125 = arith.mulf %123, %124 : vector<8x128xf32>
    %126 = arith.truncf %125 : vector<8x128xf32> to vector<8x128xbf16>
    %cst_43 = arith.constant dense<0.000000e+00> : vector<128x128xf32>
    %127 = tpu.matmul %102, %126, %cst_43 {dimension_numbers = #tpu.dot_dimension_numbers<[0], [0], [1], [1], [0, 1, 1, 1], [], []>} : vector<8x128xbf16>, vector<8x128xbf16>, vector<128x128xf32> -> vector<128x128xf32>
    %cst_44 = arith.constant dense<0.000000e+00> : vector<128xf32>
    %128 = vector.multi_reduction <add>, %125, %cst_44 [0] : vector<8x128xf32> to vector<128xf32>
    %129 = vector.shape_cast %128 : vector<128xf32> to vector<1x128xf32>
    %cst_45 = arith.constant 1.000000e-01 : f32
    %130 = vector.broadcast %cst_45 : f32 to vector<128x128xf32>
    %131 = arith.mulf %130, %127 : vector<128x128xf32>
    %132 = arith.subf %95, %131 : vector<128x128xf32>
    %cst_46 = arith.constant 1.000000e-01 : f32
    %133 = vector.broadcast %cst_46 : f32 to vector<1x128xf32>
    %134 = arith.mulf %133, %129 : vector<1x128xf32>
    %135 = arith.subf %98, %134 : vector<1x128xf32>
    %c0_47 = arith.constant 0 : index
    %c0_48 = arith.constant 0 : index
    %c0_49 = arith.constant 0 : index
    %136 = vector.load %arg4[%c0_47, %c0_48, %c0_49] : memref<1x8x1xi32, #tpu.memory_space<vmem>>, vector<1x8x1xi32>
    %137 = vector.shape_cast %136 : vector<1x8x1xi32> to vector<8x1xi32>
    %138 = arith.truncf %17 : vector<8x128xf32> to vector<8x128xbf16>
    %139 = arith.truncf %132 : vector<128x128xf32> to vector<128x128xbf16>
    %cst_50 = arith.constant dense<0.000000e+00> : vector<8x128xf32>
    %140 = tpu.matmul %138, %139, %cst_50 {dimension_numbers = #tpu.dot_dimension_numbers<[1], [0], [0], [1], [0, 0, 1, 1], [], []>} : vector<8x128xbf16>, vector<128x128xbf16>, vector<8x128xf32> -> vector<8x128xf32>
    %141 = vector.broadcast %135 : vector<1x128xf32> to vector<8x128xf32>
    %142 = arith.addf %140, %141 : vector<8x128xf32>
    %cst_51 = arith.constant -1.000000e+30 : f32
    %143 = vector.broadcast %cst_51 : f32 to vector<8x128xf32>
    %144 = arith.select %20, %142, %143 : vector<8x128xi1>, vector<8x128xf32>
    %cst_52 = arith.constant dense<0xFF800000> : vector<8xf32>
    %145 = vector.multi_reduction <maximumf>, %144, %cst_52 [1] : vector<8x128xf32> to vector<8xf32>
    %146 = vector.shape_cast %145 : vector<8xf32> to vector<8x1xf32>
    %147 = vector.broadcast %146 : vector<8x1xf32> to vector<8x128xf32>
    %148 = arith.subf %144, %147 : vector<8x128xf32>
    %149 = math.exp %148 : vector<8x128xf32>
    %cst_53 = arith.constant dense<0.000000e+00> : vector<8xf32>
    %150 = vector.multi_reduction <add>, %149, %cst_53 [1] : vector<8x128xf32> to vector<8xf32>
    %151 = vector.shape_cast %150 : vector<8xf32> to vector<8x1xf32>
    %152 = math.log %151 : vector<8x1xf32>
    %153 = vector.broadcast %152 : vector<8x1xf32> to vector<8x128xf32>
    %154 = arith.subf %148, %153 : vector<8x128xf32>
    %155 = vector.broadcast %137 : vector<8x1xi32> to vector<8x128xi32>
    %156 = arith.cmpi eq, %18, %155 : vector<8x128xi32>
    %157 = arith.extui %156 : vector<8x128xi1> to vector<8x128xi32>
    %158 = arith.sitofp %157 : vector<8x128xi32> to vector<8x128xf32>
    %159 = arith.mulf %158, %154 : vector<8x128xf32>
    %160 = vector.shape_cast %159 : vector<8x128xf32> to vector<1x8x128xf32>
    %cst_54 = arith.constant dense<0.000000e+00> : vector<1xf32>
    %161 = vector.multi_reduction <add>, %160, %cst_54 [1, 2] : vector<1x8x128xf32> to vector<1xf32>
    %162 = vector.shape_cast %161 : vector<1xf32> to vector<1x1x1xf32>
    %163 = vector.extract %162[0, 0, 0] : f32 from vector<1x1x1xf32>
    %cst_55 = arith.constant 0.000000e+00 : f32
    %164 = arith.subf %cst_55, %163 : f32
    %cst_56 = arith.constant 1.250000e-01 : f32
    %165 = arith.mulf %164, %cst_56 : f32
    %cst_57 = arith.constant dense<0xFF800000> : vector<8xf32>
    %166 = vector.multi_reduction <maximumf>, %144, %cst_57 [1] : vector<8x128xf32> to vector<8xf32>
    %167 = vector.shape_cast %166 : vector<8xf32> to vector<8x1xf32>
    %168 = vector.broadcast %167 : vector<8x1xf32> to vector<8x128xf32>
    %169 = arith.cmpf oeq, %144, %168 : vector<8x128xf32>
    %c128_i32 = arith.constant 128 : i32
    %170 = vector.broadcast %c128_i32 : i32 to vector<8x128xi32>
    %171 = arith.select %169, %18, %170 : vector<8x128xi1>, vector<8x128xi32>
    %cst_58 = arith.constant dense<2147483647> : vector<8xi32>
    %172 = vector.multi_reduction <minsi>, %171, %cst_58 [1] : vector<8x128xi32> to vector<8xi32>
    %173 = vector.shape_cast %172 : vector<8xi32> to vector<8x1xi32>
    %174 = arith.cmpi eq, %173, %137 : vector<8x1xi32>
    %175 = arith.extui %174 : vector<8x1xi1> to vector<8x1xi32>
    %176 = arith.sitofp %175 : vector<8x1xi32> to vector<8x1xf32>
    %177 = vector.shape_cast %176 : vector<8x1xf32> to vector<1x8x1xf32>
    %cst_59 = arith.constant dense<0.000000e+00> : vector<1xf32>
    %178 = vector.multi_reduction <add>, %177, %cst_59 [1, 2] : vector<1x8x1xf32> to vector<1xf32>
    %179 = vector.shape_cast %178 : vector<1xf32> to vector<1x1x1xf32>
    %180 = vector.extract %179[0, 0, 0] : f32 from vector<1x1x1xf32>
    %c0_60 = arith.constant 0 : index
    %c0_61 = arith.constant 0 : index
    %c0_62 = arith.constant 0 : index
    %181 = vector.load %arg9[%c0_60, %c0_61, %c0_62] : memref<1x8x128xf32, #tpu.memory_space<vmem>>, vector<1x8x128xf32>
    %182 = vector.shape_cast %181 : vector<1x8x128xf32> to vector<8x128xf32>
    %183 = vector.shape_cast %144 : vector<8x128xf32> to vector<1x8x128xf32>
    tpu.vector_store %arg9[%c0_60, %c0_61, %c0_62], %183 {strides = array<i32>} : memref<1x8x128xf32, #tpu.memory_space<vmem>>, vector<1x8x128xf32>,
    %184 = vector.broadcast %165 : f32 to vector<8x128xf32>
    %c0_63 = arith.constant 0 : index
    %c0_64 = arith.constant 0 : index
    %c0_65 = arith.constant 0 : index
    %185 = vector.load %arg10[%c0_63, %c0_64, %c0_65] : memref<1x8x128xf32, #tpu.memory_space<vmem>>, vector<1x8x128xf32>
    %186 = vector.shape_cast %185 : vector<1x8x128xf32> to vector<8x128xf32>
    %187 = vector.shape_cast %184 : vector<8x128xf32> to vector<1x8x128xf32>
    tpu.vector_store %arg10[%c0_63, %c0_64, %c0_65], %187 {strides = array<i32>} : memref<1x8x128xf32, #tpu.memory_space<vmem>>, vector<1x8x128xf32>,
    %188 = vector.broadcast %180 : f32 to vector<8x128xf32>
    %c0_66 = arith.constant 0 : index
    %c0_67 = arith.constant 0 : index
    %c0_68 = arith.constant 0 : index
    %189 = vector.load %arg11[%c0_66, %c0_67, %c0_68] : memref<1x8x128xf32, #tpu.memory_space<vmem>>, vector<1x8x128xf32>
    %190 = vector.shape_cast %189 : vector<1x8x128xf32> to vector<8x128xf32>
    %191 = vector.shape_cast %188 : vector<8x128xf32> to vector<1x8x128xf32>
    tpu.vector_store %arg11[%c0_66, %c0_67, %c0_68], %191 {strides = array<i32>} : memref<1x8x128xf32, #tpu.memory_space<vmem>>, vector<1x8x128xf32>,
    return
  }
  func.func @transform_0(%arg0: i32) -> (i32, i32, i32) {
    %c0_i32 = arith.constant 0 : i32
    %c0_i32_0 = arith.constant 0 : i32
    %c0_i32_1 = arith.constant 0 : i32
    return %arg0, %c0_i32, %c0_i32_0 : i32, i32, i32
  }
  func.func @transform_1(%arg0: i32) -> (i32, i32, i32) {
    %c0_i32 = arith.constant 0 : i32
    %c0_i32_0 = arith.constant 0 : i32
    %c0_i32_1 = arith.constant 0 : i32
    return %arg0, %c0_i32, %c0_i32_0 : i32, i32, i32
  }
  func.func @transform_2(%arg0: i32) -> (i32, i32, i32, i32) {
    %c0_i32 = arith.constant 0 : i32
    %c0_i32_0 = arith.constant 0 : i32
    %c0_i32_1 = arith.constant 0 : i32
    %c0_i32_2 = arith.constant 0 : i32
    return %arg0, %c0_i32, %c0_i32_0, %c0_i32_1 : i32, i32, i32, i32
  }
  func.func @transform_3(%arg0: i32) -> (i32, i32, i32) {
    %c0_i32 = arith.constant 0 : i32
    %c0_i32_0 = arith.constant 0 : i32
    %c0_i32_1 = arith.constant 0 : i32
    return %arg0, %c0_i32, %c0_i32_0 : i32, i32, i32
  }
  func.func @transform_4(%arg0: i32) -> (i32, i32) {
    %c0_i32 = arith.constant 0 : i32
    %c0_i32_0 = arith.constant 0 : i32
    %c0_i32_1 = arith.constant 0 : i32
    return %c0_i32, %c0_i32_0 : i32, i32
  }
  func.func @transform_5(%arg0: i32) -> (i32, i32) {
    %c0_i32 = arith.constant 0 : i32
    %c0_i32_0 = arith.constant 0 : i32
    %c0_i32_1 = arith.constant 0 : i32
    return %c0_i32, %c0_i32_0 : i32, i32
  }
  func.func @transform_6(%arg0: i32) -> (i32, i32) {
    %c0_i32 = arith.constant 0 : i32
    %c0_i32_0 = arith.constant 0 : i32
    %c0_i32_1 = arith.constant 0 : i32
    return %c0_i32, %c0_i32_0 : i32, i32
  }
  func.func @transform_7(%arg0: i32) -> (i32, i32) {
    %c0_i32 = arith.constant 0 : i32
    %c0_i32_0 = arith.constant 0 : i32
    %c0_i32_1 = arith.constant 0 : i32
    return %c0_i32, %c0_i32_0 : i32, i32
  }
  func.func @transform_8(%arg0: i32) -> (i32, i32, i32) {
    %c0_i32 = arith.constant 0 : i32
    %c0_i32_0 = arith.constant 0 : i32
    %c0_i32_1 = arith.constant 0 : i32
    return %arg0, %c0_i32, %c0_i32_0 : i32, i32, i32
  }
  func.func @transform_9(%arg0: i32) -> (i32, i32, i32) {
    %c0_i32 = arith.constant 0 : i32
    %c0_i32_0 = arith.constant 0 : i32
    %c0_i32_1 = arith.constant 0 : i32
    return %arg0, %c0_i32, %c0_i32_0 : i32, i32, i32
  }
  func.func @transform_10(%arg0: i32) -> (i32, i32, i32) {
    %c0_i32 = arith.constant 0 : i32
    %c0_i32_0 = arith.constant 0 : i32
    %c0_i32_1 = arith.constant 0 : i32
    return %arg0, %c0_i32, %c0_i32_0 : i32, i32, i32
  }
}

</mosaic_0001>

<llo_original>
// kernel: meta_forward.1
$region0: #{meta_forward.1}
  #allocation0 [shape = 'u32[]', space=smem, size = 0x4, offset = 0x4, fixed_abs, tag = 'smem constant byte address 0x4 - core index']
  #allocation1 [shape = 'u32[144,128]{1,0:T(1,128)}', space=vmem, size = 0x12000, scoped, tag = 'internal scratch']
  %s0 = inlined_call_operand.vmem [shape: f32[2,16,1024], index: 0, kind: input, shape index: {}]
  %s1 = inlined_call_operand.vmem [shape: f32[2,8,1024], index: 1, kind: input, shape index: {}]
  %s2 = inlined_call_operand.vmem [shape: s32[2,2,8,1], index: 2, kind: input, shape index: {}]
  %s3 = inlined_call_operand.vmem [shape: s32[2,8,1], index: 3, kind: input, shape index: {}]
  %s4 = inlined_call_operand.vmem [shape: bf16[1024,128], index: 4, kind: input, shape index: {}]
  %s5 = inlined_call_operand.vmem [shape: f32[1,128], index: 5, kind: input, shape index: {}]
  %s6 = inlined_call_operand.vmem [shape: f32[128,128], index: 6, kind: input, shape index: {}]
  %s7 = inlined_call_operand.vmem [shape: f32[1,128], index: 7, kind: input, shape index: {}]
  %s8 = inlined_call_operand.hbm [shape: f32[2,8,128], index: 8, kind: output, shape index: {0}]
  %s9 = inlined_call_operand.vmem [shape: f32[2,8,128], index: 9, kind: output, shape index: {1}]
  %s10 = inlined_call_operand.vmem [shape: f32[2,8,128], index: 10, kind: output, shape index: {2}]
  %11 = xla_tuple %s8, %s9, %s10
  %s12 = sld [smem:[#allocation0]]
  $region81: #{meta_forward.1} parent=0
    _
  %s14 = ssub.s32 1, %s12
  %s15 = scalar_select 0, %s14, %s12
  $region1: #{meta_forward.1} parent=0
    #allocation2 [shape = 'u8[8192]{0}', space=vmem, size = 0x2000, scoped, tag = 'output window, operand 0']
    #allocation3 [shape = 's32[2]{0}', space=sflag, size = 0x8, scoped, tag = 'scoped memory for meta_forward.1']
    %16 = vsyncpa [#allocation3], 0
    %s17 = scalar_lea.sflag [#allocation3], 1
    %18 = vsyncpa %s17, 0
    loop: start=0, step=1, limit=4
    $region2: #{meta_forward.1} parent=1 // loop_pre_header
      _
    $region3: #{meta_forward.1} parent=1 // loop_header
      %s20 = sphi 0, %s24
      %p21 = scmp.ge.s32.totalorder %s20, 4
      %s30 = sphi 0, %s32
      %s33 = sphi 0, %s30
      %s34 = sphi 0, %s33
      %s50 = sphi 0, %s34
      %s56 = sphi 0, %s58
      %s59 = sphi 0, %s56
      %s60 = sphi 0, %s59
      %s76 = sphi 0, %s60
      %s82 = sphi 0, %s84
      %s85 = sphi 0, %s82
      %s86 = sphi 0, %s85
      %s102 = sphi 0, %s86
      %s108 = sphi 0, %s110
      %s111 = sphi 0, %s108
      %s112 = sphi 0, %s111
      %s128 = sphi 0, %s112
      %s132 = sphi 0, %s132
      %s134 = sphi 0, %s132
      %s135 = sphi 0, %s134
      %s149 = sphi 0, %s135
      %s153 = sphi 0, %s153
      %s155 = sphi 0, %s153
      %s156 = sphi 0, %s155
      %s170 = sphi 0, %s156
      %s174 = sphi 0, %s174
      %s176 = sphi 0, %s174
      %s177 = sphi 0, %s176
      %s191 = sphi 0, %s177
      %s195 = sphi 0, %s195
      %s197 = sphi 0, %s195
      %s198 = sphi 0, %s197
      %s212 = sphi 0, %s198
      %s218 = sphi 0, %s220
      %s221 = sphi 0, %s218
      %s222 = sphi 0, %s221
      %s238 = sphi 0, %s222
      %s244 = sphi 0, %s246
      %s247 = sphi 0, %s244
      %s248 = sphi 0, %s247
      %s264 = sphi 0, %s248
      %s270 = sphi 0, %s272
      %s273 = sphi 0, %s270
      %s274 = sphi 0, %s273
      %s290 = sphi 0, %s274
    $region4: #{meta_forward.1} parent=1 // loop_header_branch
      %23 = sbr.rel (%p21) target = $region8
    $region5: #{meta_forward.1} parent=1 // loop_body
      %s25 = ssub.s32 %s20, 1
      %s26 = ssub.s32 %s20, 2
      %s27 = sadd.s32 %s20, 1
      %s28 = ssub.s32 %s20, %s27
      %p29 = scmp.eq.s32.totalorder %s28, 0
      %s31 = sadd.s32 %s30, 1
      %s32 = scalar_select %p29, %s30, %s31
      %p35 = pneg %p29
      %p36 = scmp.eq.s32.totalorder %s20, 1
      %p37 = por %p35, %p36
      %p38 = scmp.ne.s32.totalorder %s30, %s33
      %p39 = scmp.eq.s32.totalorder %s20, 0
      %p40 = por %p38, %p39
      %p41 = scmp.ne.s32.totalorder %s30, %s33
      %p42 = scmp.eq.s32.totalorder %s25, 1
      %p43 = por %p41, %p42
      %p44 = scmp.ne.s32.totalorder %s33, %s34
      %p45 = scmp.eq.s32.totalorder %s25, 0
      %p46 = por %p44, %p45
      %p47 = scmp.ne.s32.totalorder %s33, %s34
      %p48 = scmp.eq.s32.totalorder %s26, 1
      %p49 = por %p47, %p48
      %p51 = scmp.ne.s32.totalorder %s34, %s50
      %p52 = scmp.eq.s32.totalorder %s26, 0
      %p53 = por %p51, %p52
      %s54 = ssub.s32 %s20, %s27
      %p55 = scmp.eq.s32.totalorder %s54, 0
      %s57 = sadd.s32 %s56, 1
      %s58 = scalar_select %p55, %s56, %s57
      %p61 = pneg %p55
      %p62 = scmp.eq.s32.totalorder %s20, 1
      %p63 = por %p61, %p62
      %p64 = scmp.ne.s32.totalorder %s56, %s59
      %p65 = scmp.eq.s32.totalorder %s20, 0
      %p66 = por %p64, %p65
      %p67 = scmp.ne.s32.totalorder %s56, %s59
      %p68 = scmp.eq.s32.totalorder %s25, 1
      %p69 = por %p67, %p68
      %p70 = scmp.ne.s32.totalorder %s59, %s60
      %p71 = scmp.eq.s32.totalorder %s25, 0
      %p72 = por %p70, %p71
      %p73 = scmp.ne.s32.totalorder %s59, %s60
      %p74 = scmp.eq.s32.totalorder %s26, 1
      %p75 = por %p73, %p74
      %p77 = scmp.ne.s32.totalorder %s60, %s76
      %p78 = scmp.eq.s32.totalorder %s26, 0
      %p79 = por %p77, %p78
      %s80 = ssub.s32 %s20, %s27
      %p81 = scmp.eq.s32.totalorder %s80, 0
      %s83 = sadd.s32 %s82, 1
      %s84 = scalar_select %p81, %s82, %s83
      %p87 = pneg %p81
      %p88 = scmp.eq.s32.totalorder %s20, 1
      %p89 = por %p87, %p88
      %p90 = scmp.ne.s32.totalorder %s82, %s85
      %p91 = scmp.eq.s32.totalorder %s20, 0
      %p92 = por %p90, %p91
      %p93 = scmp.ne.s32.totalorder %s82, %s85
      %p94 = scmp.eq.s32.totalorder %s25, 1
      %p95 = por %p93, %p94
      %p96 = scmp.ne.s32.totalorder %s85, %s86
      %p97 = scmp.eq.s32.totalorder %s25, 0
      %p98 = por %p96, %p97
      %p99 = scmp.ne.s32.totalorder %s85, %s86
      %p100 = scmp.eq.s32.totalorder %s26, 1
      %p101 = por %p99, %p100
      %p103 = scmp.ne.s32.totalorder %s86, %s102
      %p104 = scmp.eq.s32.totalorder %s26, 0
      %p105 = por %p103, %p104
      %s106 = ssub.s32 %s20, %s27
      %p107 = scmp.eq.s32.totalorder %s106, 0
      %s109 = sadd.s32 %s108, 1
      %s110 = scalar_select %p107, %s108, %s109
      %p113 = pneg %p107
      %p114 = scmp.eq.s32.totalorder %s20, 1
      %p115 = por %p113, %p114
      %p116 = scmp.ne.s32.totalorder %s108, %s111
      %p117 = scmp.eq.s32.totalorder %s20, 0
      %p118 = por %p116, %p117
      %p119 = scmp.ne.s32.totalorder %s108, %s111
      %p120 = scmp.eq.s32.totalorder %s25, 1
      %p121 = por %p119, %p120
      %p122 = scmp.ne.s32.totalorder %s111, %s112
      %p123 = scmp.eq.s32.totalorder %s25, 0
      %p124 = por %p122, %p123
      %p125 = scmp.ne.s32.totalorder %s111, %s112
      %p126 = scmp.eq.s32.totalorder %s26, 1
      %p127 = por %p125, %p126
      %p129 = scmp.ne.s32.totalorder %s112, %s128
      %p130 = scmp.eq.s32.totalorder %s26, 0
      %p131 = por %p129, %p130
      %s133 = sadd.s32 %s132, 1
      %p136 = scmp.eq.s32.totalorder %s20, 1
      %p137 = scmp.ne.s32.totalorder %s132, %s134
      %p138 = scmp.eq.s32.totalorder %s20, 0
      %p139 = por %p137, %p138
      %p140 = scmp.ne.s32.totalorder %s132, %s134
      %p141 = scmp.eq.s32.totalorder %s25, 1
      %p142 = por %p140, %p141
      %p143 = scmp.ne.s32.totalorder %s134, %s135
      %p144 = scmp.eq.s32.totalorder %s25, 0
      %p145 = por %p143, %p144
      %p146 = scmp.ne.s32.totalorder %s134, %s135
      %p147 = scmp.eq.s32.totalorder %s26, 1
      %p148 = por %p146, %p147
      %p150 = scmp.ne.s32.totalorder %s135, %s149
      %p151 = scmp.eq.s32.totalorder %s26, 0
      %p152 = por %p150, %p151
      %s154 = sadd.s32 %s153, 1
      %p157 = scmp.eq.s32.totalorder %s20, 1
      %p158 = scmp.ne.s32.totalorder %s153, %s155
      %p159 = scmp.eq.s32.totalorder %s20, 0
      %p160 = por %p158, %p159
      %p161 = scmp.ne.s32.totalorder %s153, %s155
      %p162 = scmp.eq.s32.totalorder %s25, 1
      %p163 = por %p161, %p162
      %p164 = scmp.ne.s32.totalorder %s155, %s156
      %p165 = scmp.eq.s32.totalorder %s25, 0
      %p166 = por %p164, %p165
      %p167 = scmp.ne.s32.totalorder %s155, %s156
      %p168 = scmp.eq.s32.totalorder %s26, 1
      %p169 = por %p167, %p168
      %p171 = scmp.ne.s32.totalorder %s156, %s170
      %p172 = scmp.eq.s32.totalorder %s26, 0
      %p173 = por %p171, %p172
      %s175 = sadd.s32 %s174, 1
      %p178 = scmp.eq.s32.totalorder %s20, 1
      %p179 = scmp.ne.s32.totalorder %s174, %s176
      %p180 = scmp.eq.s32.totalorder %s20, 0
      %p181 = por %p179, %p180
      %p182 = scmp.ne.s32.totalorder %s174, %s176
      %p183 = scmp.eq.s32.totalorder %s25, 1
      %p184 = por %p182, %p183
      %p185 = scmp.ne.s32.totalorder %s176, %s177
      %p186 = scmp.eq.s32.totalorder %s25, 0
      %p187 = por %p185, %p186
      %p188 = scmp.ne.s32.totalorder %s176, %s177
      %p189 = scmp.eq.s32.totalorder %s26, 1
      %p190 = por %p188, %p189
      %p192 = scmp.ne.s32.totalorder %s177, %s191
      %p193 = scmp.eq.s32.totalorder %s26, 0
      %p194 = por %p192, %p193
      %s196 = sadd.s32 %s195, 1
      %p199 = scmp.eq.s32.totalorder %s20, 1
      %p200 = scmp.ne.s32.totalorder %s195, %s197
      %p201 = scmp.eq.s32.totalorder %s20, 0
      %p202 = por %p200, %p201
      %p203 = scmp.ne.s32.totalorder %s195, %s197
      %p204 = scmp.eq.s32.totalorder %s25, 1
      %p205 = por %p203, %p204
      %p206 = scmp.ne.s32.totalorder %s197, %s198
      %p207 = scmp.eq.s32.totalorder %s25, 0
      %p208 = por %p206, %p207
      %p209 = scmp.ne.s32.totalorder %s197, %s198
      %p210 = scmp.eq.s32.totalorder %s26, 1
      %p211 = por %p209, %p210
      %p213 = scmp.ne.s32.totalorder %s198, %s212
      %p214 = scmp.eq.s32.totalorder %s26, 0
      %p215 = por %p213, %p214
      %s216 = ssub.s32 %s20, %s27
      %p217 = scmp.eq.s32.totalorder %s216, 0
      %s219 = sadd.s32 %s218, 1
      %s220 = scalar_select %p217, %s218, %s219
      %p223 = pneg %p217
      %p224 = scmp.eq.s32.totalorder %s20, 1
      %p225 = por %p223, %p224
      %p226 = scmp.ne.s32.totalorder %s218, %s221
      %p227 = scmp.eq.s32.totalorder %s20, 0
      %p228 = por %p226, %p227
      %p229 = scmp.ne.s32.totalorder %s218, %s221
      %p230 = scmp.eq.s32.totalorder %s25, 1
      %p231 = por %p229, %p230
      %p232 = scmp.ne.s32.totalorder %s221, %s222
      %p233 = scmp.eq.s32.totalorder %s25, 0
      %p234 = por %p232, %p233
      %p235 = scmp.ne.s32.totalorder %s221, %s222
      %p236 = scmp.eq.s32.totalorder %s26, 1
      %p237 = por %p235, %p236
      %p239 = scmp.ne.s32.totalorder %s222, %s238
      %p240 = scmp.eq.s32.totalorder %s26, 0
      %p241 = por %p239, %p240
      %s242 = ssub.s32 %s20, %s27
      %p243 = scmp.eq.s32.totalorder %s242, 0
      %s245 = sadd.s32 %s244, 1
      %s246 = scalar_select %p243, %s244, %s245
      %p249 = pneg %p243
      %p250 = scmp.eq.s32.totalorder %s20, 1
      %p251 = por %p249, %p250
      %p252 = scmp.ne.s32.totalorder %s244, %s247
      %p253 = scmp.eq.s32.totalorder %s20, 0
      %p254 = por %p252, %p253
      %p255 = scmp.ne.s32.totalorder %s244, %s247
      %p256 = scmp.eq.s32.totalorder %s25, 1
      %p257 = por %p255, %p256
      %p258 = scmp.ne.s32.totalorder %s247, %s248
      %p259 = scmp.eq.s32.totalorder %s25, 0
      %p260 = por %p258, %p259
      %p261 = scmp.ne.s32.totalorder %s247, %s248
      %p262 = scmp.eq.s32.totalorder %s26, 1
      %p263 = por %p261, %p262
      %p265 = scmp.ne.s32.totalorder %s248, %s264
      %p266 = scmp.eq.s32.totalorder %s26, 0
      %p267 = por %p265, %p266
      %s268 = ssub.s32 %s20, %s27
      %p269 = scmp.eq.s32.totalorder %s268, 0
      %s271 = sadd.s32 %s270, 1
      %s272 = scalar_select %p269, %s270, %s271
      %p275 = pneg %p269
      %p276 = scmp.eq.s32.totalorder %s20, 1
      %p277 = por %p275, %p276
      %p278 = scmp.ne.s32.totalorder %s270, %s273
      %p279 = scmp.eq.s32.totalorder %s20, 0
      %p280 = por %p278, %p279
      %p281 = scmp.ne.s32.totalorder %s270, %s273
      %p282 = scmp.eq.s32.totalorder %s25, 1
      %p283 = por %p281, %p282
      %p284 = scmp.ne.s32.totalorder %s273, %s274
      %p285 = scmp.eq.s32.totalorder %s25, 0
      %p286 = por %p284, %p285
      %p287 = scmp.ne.s32.totalorder %s273, %s274
      %p288 = scmp.eq.s32.totalorder %s26, 1
      %p289 = por %p287, %p288
      %p291 = scmp.ne.s32.totalorder %s274, %s290
      %p292 = scmp.eq.s32.totalorder %s26, 0
      %p293 = por %p291, %p292
      %p294 = scmp.le.s32.totalorder 1, %s20
      %p295 = scmp.lt.s32.totalorder %s20, 3
      %p296 = pnand %p294, %p295
      %p297 = pneg %p296
      // Predicated region
      $region9: #{meta_forward.1} parent=5 // pred_check
        _
      $region10: #{meta_forward.1} parent=5 // pred_check_branch
        %299 = sbr.rel (%p296) target = $region12
      $region11: #{meta_forward.1} parent=5 // pred_region
        %s300 = ssub.s32 %s20, 1
        // Predicated region
        $region13: #{meta_forward.1} parent=11 // pred_check
          %p301 = pneg %p145
        $region14: #{meta_forward.1} parent=11 // pred_check_branch
          %303 = sbr.rel (%p301) target = $region16
        $region15: #{meta_forward.1} parent=11 // pred_region
          _
        $region16: #{meta_forward.1} parent=11 // pred_fallthru
          _
        // Predicated region
        $region17: #{meta_forward.1} parent=11 // pred_check
          %p304 = pneg %p166
        $region18: #{meta_forward.1} parent=11 // pred_check_branch
          %306 = sbr.rel (%p304) target = $region20
        $region19: #{meta_forward.1} parent=11 // pred_region
          _
        $region20: #{meta_forward.1} parent=11 // pred_fallthru
          _
        // Predicated region
        $region21: #{meta_forward.1} parent=11 // pred_check
          %p307 = pneg %p187
        $region22: #{meta_forward.1} parent=11 // pred_check_branch
          %309 = sbr.rel (%p307) target = $region24
        $region23: #{meta_forward.1} parent=11 // pred_region
          _
        $region24: #{meta_forward.1} parent=11 // pred_fallthru
          _
        // Predicated region
        $region25: #{meta_forward.1} parent=11 // pred_check
          %p310 = pneg %p208
        $region26: #{meta_forward.1} parent=11 // pred_check_branch
          %312 = sbr.rel (%p310) target = $region28
        $region27: #{meta_forward.1} parent=11 // pred_region
          _
        $region28: #{meta_forward.1} parent=11 // pred_fallthru
          _
      $region12: #{meta_forward.1} parent=5 // pred_fallthru
        _
      %p313 = scmp.lt.s32.totalorder %s20, 2
      // Predicated region
      $region29: #{meta_forward.1} parent=5 // pred_check
        %p314 = pneg %p313
      $region30: #{meta_forward.1} parent=5 // pred_check_branch
        %316 = sbr.rel (%p314) target = $region32
      $region31: #{meta_forward.1} parent=5 // pred_region
        // Predicated region
        $region33: #{meta_forward.1} parent=31 // pred_check
          %p317 = pneg %p40
        $region34: #{meta_forward.1} parent=31 // pred_check_branch
          %319 = sbr.rel (%p317) target = $region36
        $region35: #{meta_forward.1} parent=31 // pred_region
          %p320 = scmp.lt.s32.totalorder %s20, 1
          %s321 = scalar_select %p320, %s20, 1
          %s322 = smul.addr %s321, 16
          %s323 = smul.addr %s322, 8
          %s324 = scalar_lea.vmem %s0, %s323
        $region36: #{meta_forward.1} parent=31 // pred_fallthru
          _
        // Predicated region
        $region37: #{meta_forward.1} parent=31 // pred_check
          %p325 = pneg %p66
        $region38: #{meta_forward.1} parent=31 // pred_check_branch
          %327 = sbr.rel (%p325) target = $region40
        $region39: #{meta_forward.1} parent=31 // pred_region
          %p328 = scmp.lt.s32.totalorder %s20, 1
          %s329 = scalar_select %p328, %s20, 1
          %s330 = smul.addr %s329, 8
          %s331 = smul.addr %s330, 8
          %s332 = scalar_lea.vmem %s1, %s331
        $region40: #{meta_forward.1} parent=31 // pred_fallthru
          _
        // Predicated region
        $region41: #{meta_forward.1} parent=31 // pred_check
          %p333 = pneg %p92
        $region42: #{meta_forward.1} parent=31 // pred_check_branch
          %335 = sbr.rel (%p333) target = $region44
        $region43: #{meta_forward.1} parent=31 // pred_region
          %p336 = scmp.lt.s32.totalorder %s20, 1
          %s337 = scalar_select %p336, %s20, 1
          %s338 = smul.addr %s337, 2
          %s339 = smul.addr %s338, 8
          %s340 = scalar_lea.vmem %s2, %s339
        $region44: #{meta_forward.1} parent=31 // pred_fallthru
          _
        // Predicated region
        $region45: #{meta_forward.1} parent=31 // pred_check
          %p341 = pneg %p118
        $region46: #{meta_forward.1} parent=31 // pred_check_branch
          %343 = sbr.rel (%p341) target = $region48
        $region47: #{meta_forward.1} parent=31 // pred_region
          %p344 = scmp.lt.s32.totalorder %s20, 1
          %s345 = scalar_select %p344, %s20, 1
          %s346 = smul.addr %s345, 8
          %s347 = scalar_lea.vmem %s3, %s346
        $region48: #{meta_forward.1} parent=31 // pred_fallthru
          _
      $region32: #{meta_forward.1} parent=5 // pred_fallthru
        _
      %p348 = scmp.le.s32.totalorder 1, %s20
      %p349 = scmp.lt.s32.totalorder %s20, 3
      %p350 = pnand %p348, %p349
      %p351 = pneg %p350
      // Predicated region
      $region49: #{meta_forward.1} parent=5 // pred_check
        _
      $region50: #{meta_forward.1} parent=5 // pred_check_branch
        %353 = sbr.rel (%p350) target = $region52
      $region51: #{meta_forward.1} parent=5 // pred_region
        %s354 = ssub.s32 %s20, 1
        %p355 = scmp.lt.s32.totalorder %s25, 1
        %s356 = scalar_select %p355, %s25, 1
        %s357 = smul.addr %s356, 16
        %s358 = smul.addr %s357, 8
        %s359 = scalar_lea.vmem %s0, %s358
        %p360 = pneg %p46
        %p361 = pneg %p43
        %p362 = scmp.lt.s32.totalorder %s25, 1
        %s363 = scalar_select %p362, %s25, 1
        %s364 = smul.addr %s363, 8
        %s365 = smul.addr %s364, 8
        %s366 = scalar_lea.vmem %s1, %s365
        %p367 = pneg %p72
        %p368 = pneg %p69
        %p369 = scmp.lt.s32.totalorder %s25, 1
        %s370 = scalar_select %p369, %s25, 1
        %s371 = smul.addr %s370, 2
        %s372 = smul.addr %s371, 8
        %s373 = scalar_lea.vmem %s2, %s372
        %p374 = pneg %p98
        %p375 = pneg %p95
        %p376 = scmp.lt.s32.totalorder %s25, 1
        %s377 = scalar_select %p376, %s25, 1
        %s378 = smul.addr %s377, 8
        %s379 = scalar_lea.vmem %s3, %s378
        %p380 = pneg %p124
        %p381 = pneg %p121
        %p382 = pneg %p145
        %p383 = pneg %p142
        %p384 = pneg %p166
        %p385 = pneg %p163
        %p386 = pneg %p187
        %p387 = pneg %p184
        %p388 = pneg %p208
        %p389 = pneg %p205
        %p390 = pneg %p234
        %p391 = pneg %p231
        %s392 = sand.u32 %s221, 1
        %s393 = scalar_lea.sflag [#allocation3], %s392
        %s394 = sand.u32 %s221, 1
        %s395 = smul.addr %s394, 8
        %s396 = scalar_lea.vmem [#allocation2], %s395
        %p397 = pneg %p260
        %p398 = pneg %p257
        %p399 = scmp.lt.s32.totalorder %s25, 1
        %s400 = scalar_select %p399, %s25, 1
        %s401 = smul.addr %s400, 8
        %s402 = scalar_lea.vmem %s9, %s401
        %p403 = pneg %p286
        %p404 = pneg %p283
        %p405 = scmp.lt.s32.totalorder %s25, 1
        %s406 = scalar_select %p405, %s25, 1
        %s407 = smul.addr %s406, 8
        %s408 = scalar_lea.vmem %s10, %s407
        %p409 = scmp.lt.s32.totalorder %s25, 1
        %s410 = scalar_select %p409, %s25, 1
        %s411 = smul.addr %s410, 16
        %s412 = smul.addr %s411, 8
        %s413 = scalar_lea.vmem %s0, %s412
        %p414 = scmp.lt.s32.totalorder %s25, 1
        %s415 = scalar_select %p414, %s25, 1
        %s416 = smul.addr %s415, 8
        %s417 = smul.addr %s416, 8
        %s418 = scalar_lea.vmem %s1, %s417
        %p419 = scmp.lt.s32.totalorder %s25, 1
        %s420 = scalar_select %p419, %s25, 1
        %s421 = smul.addr %s420, 2
        %s422 = smul.addr %s421, 8
        %s423 = scalar_lea.vmem %s2, %s422
        %p424 = scmp.lt.s32.totalorder %s25, 1
        %s425 = scalar_select %p424, %s25, 1
        %s426 = smul.addr %s425, 8
        %s427 = scalar_lea.vmem %s3, %s426
        %p428 = scmp.lt.s32.totalorder %s25, 1
        %s429 = scalar_select %p428, %s25, 1
        %s430 = smul.addr %s429, 8
        %s431 = scalar_lea.vmem %s9, %s430
        %p432 = scmp.lt.s32.totalorder %s25, 1
        %s433 = scalar_select %p432, %s25, 1
        %s434 = smul.addr %s433, 8
        %s435 = scalar_lea.vmem %s10, %s434
        %v437 = vld [vmem:[%s4] sm:$0xf]
        %v438 = vld [vmem:[%s4 + $0x4] sm:$0xf]
        %v439 = vld [vmem:[%s4 + $0x8] sm:$0xf]
        %v440 = vld [vmem:[%s4 + $0xc] sm:$0xf]
        %v441 = vld [vmem:[%s4 + $0x10] sm:$0xf]
        %v442 = vld [vmem:[%s4 + $0x14] sm:$0xf]
        %v443 = vld [vmem:[%s4 + $0x18] sm:$0xf]
        %v444 = vld [vmem:[%s4 + $0x1c] sm:$0xf]
        %v445 = vld [vmem:[%s4 + $0x20] sm:$0xf]
        %v446 = vld [vmem:[%s4 + $0x24] sm:$0xf]
        %v447 = vld [vmem:[%s4 + $0x28] sm:$0xf]
        %v448 = vld [vmem:[%s4 + $0x2c] sm:$0xf]
        %v449 = vld [vmem:[%s4 + $0x30] sm:$0xf]
        %v450 = vld [vmem:[%s4 + $0x34] sm:$0xf]
        %v451 = vld [vmem:[%s4 + $0x38] sm:$0xf]
        %v452 = vld [vmem:[%s4 + $0x3c] sm:$0xf]
        %v453 = vld [vmem:[%s4 + $0x40] sm:$0xf]
        %v454 = vld [vmem:[%s4 + $0x44] sm:$0xf]
        %v455 = vld [vmem:[%s4 + $0x48] sm:$0xf]
        %v456 = vld [vmem:[%s4 + $0x4c] sm:$0xf]
        %v457 = vld [vmem:[%s4 + $0x50] sm:$0xf]
        %v458 = vld [vmem:[%s4 + $0x54] sm:$0xf]
        %v459 = vld [vmem:[%s4 + $0x58] sm:$0xf]
        %v460 = vld [vmem:[%s4 + $0x5c] sm:$0xf]
        %v461 = vld [vmem:[%s4 + $0x60] sm:$0xf]
        %v462 = vld [vmem:[%s4 + $0x64] sm:$0xf]
        %v463 = vld [vmem:[%s4 + $0x68] sm:$0xf]
        %v464 = vld [vmem:[%s4 + $0x6c] sm:$0xf]
        %v465 = vld [vmem:[%s4 + $0x70] sm:$0xf]
        %v466 = vld [vmem:[%s4 + $0x74] sm:$0xf]
        %v467 = vld [vmem:[%s4 + $0x78] sm:$0xf]
        %v468 = vld [vmem:[%s4 + $0x7c] sm:$0xf]
        %v469 = vld [vmem:[%s4 + $0x80] sm:$0xf]
        %v470 = vld [vmem:[%s4 + $0x84] sm:$0xf]
        %v471 = vld [vmem:[%s4 + $0x88] sm:$0xf]
        %v472 = vld [vmem:[%s4 + $0x8c] sm:$0xf]
        %v473 = vld [vmem:[%s4 + $0x90] sm:$0xf]
        %v474 = vld [vmem:[%s4 + $0x94] sm:$0xf]
        %v475 = vld [vmem:[%s4 + $0x98] sm:$0xf]
        %v476 = vld [vmem:[%s4 + $0x9c] sm:$0xf]
        %v477 = vld [vmem:[%s4 + $0xa0] sm:$0xf]
        %v478 = vld [vmem:[%s4 + $0xa4] sm:$0xf]
        %v479 = vld [vmem:[%s4 + $0xa8] sm:$0xf]
        %v480 = vld [vmem:[%s4 + $0xac] sm:$0xf]
        %v481 = vld [vmem:[%s4 + $0xb0] sm:$0xf]
        %v482 = vld [vmem:[%s4 + $0xb4] sm:$0xf]
        %v483 = vld [vmem:[%s4 + $0xb8] sm:$0xf]
        %v484 = vld [vmem:[%s4 + $0xbc] sm:$0xf]
        %v485 = vld [vmem:[%s4 + $0xc0] sm:$0xf]
        %v486 = vld [vmem:[%s4 + $0xc4] sm:$0xf]
        %v487 = vld [vmem:[%s4 + $0xc8] sm:$0xf]
        %v488 = vld [vmem:[%s4 + $0xcc] sm:$0xf]
        %v489 = vld [vmem:[%s4 + $0xd0] sm:$0xf]
        %v490 = vld [vmem:[%s4 + $0xd4] sm:$0xf]
        %v491 = vld [vmem:[%s4 + $0xd8] sm:$0xf]
        %v492 = vld [vmem:[%s4 + $0xdc] sm:$0xf]
        %v493 = vld [vmem:[%s4 + $0xe0] sm:$0xf]
        %v494 = vld [vmem:[%s4 + $0xe4] sm:$0xf]
        %v495 = vld [vmem:[%s4 + $0xe8] sm:$0xf]
        %v496 = vld [vmem:[%s4 + $0xec] sm:$0xf]
        %v497 = vld [vmem:[%s4 + $0xf0] sm:$0xf]
        %v498 = vld [vmem:[%s4 + $0xf4] sm:$0xf]
        %v499 = vld [vmem:[%s4 + $0xf8] sm:$0xf]
        %v500 = vld [vmem:[%s4 + $0xfc] sm:$0xf]
        %v501 = vld [vmem:[%s4 + $0x100] sm:$0xf]
        %v502 = vld [vmem:[%s4 + $0x104] sm:$0xf]
        %v503 = vld [vmem:[%s4 + $0x108] sm:$0xf]
        %v504 = vld [vmem:[%s4 + $0x10c] sm:$0xf]
        %v505 = vld [vmem:[%s4 + $0x110] sm:$0xf]
        %v506 = vld [vmem:[%s4 + $0x114] sm:$0xf]
        %v507 = vld [vmem:[%s4 + $0x118] sm:$0xf]
        %v508 = vld [vmem:[%s4 + $0x11c] sm:$0xf]
        %v509 = vld [vmem:[%s4 + $0x120] sm:$0xf]
        %v510 = vld [vmem:[%s4 + $0x124] sm:$0xf]
        %v511 = vld [vmem:[%s4 + $0x128] sm:$0xf]
        %v512 = vld [vmem:[%s4 + $0x12c] sm:$0xf]
        %v513 = vld [vmem:[%s4 + $0x130] sm:$0xf]
        %v514 = vld [vmem:[%s4 + $0x134] sm:$0xf]
        %v515 = vld [vmem:[%s4 + $0x138] sm:$0xf]
        %v516 = vld [vmem:[%s4 + $0x13c] sm:$0xf]
        %v517 = vld [vmem:[%s4 + $0x140] sm:$0xf]
        %v518 = vld [vmem:[%s4 + $0x144] sm:$0xf]
        %v519 = vld [vmem:[%s4 + $0x148] sm:$0xf]
        %v520 = vld [vmem:[%s4 + $0x14c] sm:$0xf]
        %v521 = vld [vmem:[%s4 + $0x150] sm:$0xf]
        %v522 = vld [vmem:[%s4 + $0x154] sm:$0xf]
        %v523 = vld [vmem:[%s4 + $0x158] sm:$0xf]
        %v524 = vld [vmem:[%s4 + $0x15c] sm:$0xf]
        %v525 = vld [vmem:[%s4 + $0x160] sm:$0xf]
        %v526 = vld [vmem:[%s4 + $0x164] sm:$0xf]
        %v527 = vld [vmem:[%s4 + $0x168] sm:$0xf]
        %v528 = vld [vmem:[%s4 + $0x16c] sm:$0xf]
        %v529 = vld [vmem:[%s4 + $0x170] sm:$0xf]
        %v530 = vld [vmem:[%s4 + $0x174] sm:$0xf]
        %v531 = vld [vmem:[%s4 + $0x178] sm:$0xf]
        %v532 = vld [vmem:[%s4 + $0x17c] sm:$0xf]
        %v533 = vld [vmem:[%s4 + $0x180] sm:$0xf]
        %v534 = vld [vmem:[%s4 + $0x184] sm:$0xf]
        %v535 = vld [vmem:[%s4 + $0x188] sm:$0xf]
        %v536 = vld [vmem:[%s4 + $0x18c] sm:$0xf]
        %v537 = vld [vmem:[%s4 + $0x190] sm:$0xf]
        %v538 = vld [vmem:[%s4 + $0x194] sm:$0xf]
        %v539 = vld [vmem:[%s4 + $0x198] sm:$0xf]
        %v540 = vld [vmem:[%s4 + $0x19c] sm:$0xf]
        %v541 = vld [vmem:[%s4 + $0x1a0] sm:$0xf]
        %v542 = vld [vmem:[%s4 + $0x1a4] sm:$0xf]
        %v543 = vld [vmem:[%s4 + $0x1a8] sm:$0xf]
        %v544 = vld [vmem:[%s4 + $0x1ac] sm:$0xf]
        %v545 = vld [vmem:[%s4 + $0x1b0] sm:$0xf]
        %v546 = vld [vmem:[%s4 + $0x1b4] sm:$0xf]
        %v547 = vld [vmem:[%s4 + $0x1b8] sm:$0xf]
        %v548 = vld [vmem:[%s4 + $0x1bc] sm:$0xf]
        %v549 = vld [vmem:[%s4 + $0x1c0] sm:$0xf]
        %v550 = vld [vmem:[%s4 + $0x1c4] sm:$0xf]
        %v551 = vld [vmem:[%s4 + $0x1c8] sm:$0xf]
        %v552 = vld [vmem:[%s4 + $0x1cc] sm:$0xf]
        %v553 = vld [vmem:[%s4 + $0x1d0] sm:$0xf]
        %v554 = vld [vmem:[%s4 + $0x1d4] sm:$0xf]
        %v555 = vld [vmem:[%s4 + $0x1d8] sm:$0xf]
        %v556 = vld [vmem:[%s4 + $0x1dc] sm:$0xf]
        %v557 = vld [vmem:[%s4 + $0x1e0] sm:$0xf]
        %v558 = vld [vmem:[%s4 + $0x1e4] sm:$0xf]
        %v559 = vld [vmem:[%s4 + $0x1e8] sm:$0xf]
        %v560 = vld [vmem:[%s4 + $0x1ec] sm:$0xf]
        %v561 = vld [vmem:[%s4 + $0x1f0] sm:$0xf]
        %v562 = vld [vmem:[%s4 + $0x1f4] sm:$0xf]
        %v563 = vld [vmem:[%s4 + $0x1f8] sm:$0xf]
        %v564 = vld [vmem:[%s4 + $0x1fc] sm:$0xf]
        %v565 = vld [vmem:[%s5] sm:$0x1]
        %v566 = vld [vmem:[%s413] sm:$0xff]
        %v567 = vld [vmem:[%s413 + $0x8] sm:$0xff]
        %v568 = vld [vmem:[%s413 + $0x10] sm:$0xff]
        %v569 = vld [vmem:[%s413 + $0x18] sm:$0xff]
        %v570 = vld [vmem:[%s413 + $0x20] sm:$0xff]
        %v571 = vld [vmem:[%s413 + $0x28] sm:$0xff]
        %v572 = vld [vmem:[%s413 + $0x30] sm:$0xff]
        %v573 = vld [vmem:[%s413 + $0x38] sm:$0xff]
        %v574 = vld [vmem:[%s413 + $0x40] sm:$0xff]
        %v575 = vld [vmem:[%s413 + $0x48] sm:$0xff]
        %v576 = vld [vmem:[%s413 + $0x50] sm:$0xff]
        %v577 = vld [vmem:[%s413 + $0x58] sm:$0xff]
        %v578 = vld [vmem:[%s413 + $0x60] sm:$0xff]
        %v579 = vld [vmem:[%s413 + $0x68] sm:$0xff]
        %v580 = vld [vmem:[%s413 + $0x70] sm:$0xff]
        %v581 = vld [vmem:[%s413 + $0x78] sm:$0xff]
        %v582 = vpack.c.bf16 %v574, %v566
        %v583 = vpack.c.bf16 %v575, %v567
        %v584 = vpack.c.bf16 %v576, %v568
        %v585 = vpack.c.bf16 %v577, %v569
        %v586 = vpack.c.bf16 %v578, %v570
        %v587 = vpack.c.bf16 %v579, %v571
        %v588 = vpack.c.bf16 %v580, %v572
        %v589 = vpack.c.bf16 %v581, %v573
        %v591 = vlaneseq
        %v592 = vshrl.u32 %v591, 7
        %v593 = vsub.s32 0, %v592
        %v594 = vrot.slane %v565, %v593
        %v724 = vunpack.c.l.b16 %v437
        %v725 = vunpack.c.l.b16 %v438
        %v726 = vunpack.c.l.b16 %v439
        %v727 = vunpack.c.l.b16 %v440
        %v728 = vunpack.c.l.b16 %v441
        %v729 = vunpack.c.l.b16 %v442
        %v730 = vunpack.c.l.b16 %v443
        %v731 = vunpack.c.l.b16 %v444
        %v732 = vunpack.c.l.b16 %v445
        %v733 = vunpack.c.l.b16 %v446
        %v734 = vunpack.c.l.b16 %v447
        %v735 = vunpack.c.l.b16 %v448
        %v736 = vunpack.c.l.b16 %v449
        %v737 = vunpack.c.l.b16 %v450
        %v738 = vunpack.c.l.b16 %v451
        %v739 = vunpack.c.l.b16 %v452
        %v740 = vunpack.c.l.b16 %v453
        %v741 = vunpack.c.l.b16 %v454
        %v742 = vunpack.c.l.b16 %v455
        %v743 = vunpack.c.l.b16 %v456
        %v744 = vunpack.c.l.b16 %v457
        %v745 = vunpack.c.l.b16 %v458
        %v746 = vunpack.c.l.b16 %v459
        %v747 = vunpack.c.l.b16 %v460
        %v748 = vunpack.c.l.b16 %v461
        %v749 = vunpack.c.l.b16 %v462
        %v750 = vunpack.c.l.b16 %v463
        %v751 = vunpack.c.l.b16 %v464
        %v752 = vunpack.c.l.b16 %v465
        %v753 = vunpack.c.l.b16 %v466
        %v754 = vunpack.c.l.b16 %v467
        %v755 = vunpack.c.l.b16 %v468
        %v756 = vunpack.c.l.b16 %v469
        %v757 = vunpack.c.l.b16 %v470
        %v758 = vunpack.c.l.b16 %v471
        %v759 = vunpack.c.l.b16 %v472
        %v760 = vunpack.c.l.b16 %v473
        %v761 = vunpack.c.l.b16 %v474
        %v762 = vunpack.c.l.b16 %v475
        %v763 = vunpack.c.l.b16 %v476
        %v764 = vunpack.c.l.b16 %v477
        %v765 = vunpack.c.l.b16 %v478
        %v766 = vunpack.c.l.b16 %v479
        %v767 = vunpack.c.l.b16 %v480
        %v768 = vunpack.c.l.b16 %v481
        %v769 = vunpack.c.l.b16 %v482
        %v770 = vunpack.c.l.b16 %v483
        %v771 = vunpack.c.l.b16 %v484
        %v772 = vunpack.c.l.b16 %v485
        %v773 = vunpack.c.l.b16 %v486
        %v774 = vunpack.c.l.b16 %v487
        %v775 = vunpack.c.l.b16 %v488
        %v776 = vunpack.c.l.b16 %v489
        %v777 = vunpack.c.l.b16 %v490
        %v778 = vunpack.c.l.b16 %v491
        %v779 = vunpack.c.l.b16 %v492
        %v780 = vunpack.c.l.b16 %v493
        %v781 = vunpack.c.l.b16 %v494
        %v782 = vunpack.c.l.b16 %v495
        %v783 = vunpack.c.l.b16 %v496
        %v784 = vunpack.c.l.b16 %v497
        %v785 = vunpack.c.l.b16 %v498
        %v786 = vunpack.c.l.b16 %v499
        %v787 = vunpack.c.l.b16 %v500
        %v788 = vunpack.c.l.b16 %v501
        %v789 = vunpack.c.l.b16 %v502
        %v790 = vunpack.c.l.b16 %v503
        %v791 = vunpack.c.l.b16 %v504
        %v792 = vunpack.c.l.b16 %v505
        %v793 = vunpack.c.l.b16 %v506
        %v794 = vunpack.c.l.b16 %v507
        %v795 = vunpack.c.l.b16 %v508
        %v796 = vunpack.c.l.b16 %v509
        %v797 = vunpack.c.l.b16 %v510
        %v798 = vunpack.c.l.b16 %v511
        %v799 = vunpack.c.l.b16 %v512
        %v800 = vunpack.c.l.b16 %v513
        %v801 = vunpack.c.l.b16 %v514
        %v802 = vunpack.c.l.b16 %v515
        %v803 = vunpack.c.l.b16 %v516
        %v804 = vunpack.c.l.b16 %v517
        %v805 = vunpack.c.l.b16 %v518
        %v806 = vunpack.c.l.b16 %v519
        %v807 = vunpack.c.l.b16 %v520
        %v808 = vunpack.c.l.b16 %v521
        %v809 = vunpack.c.l.b16 %v522
        %v810 = vunpack.c.l.b16 %v523
        %v811 = vunpack.c.l.b16 %v524
        %v812 = vunpack.c.l.b16 %v525
        %v813 = vunpack.c.l.b16 %v526
        %v814 = vunpack.c.l.b16 %v527
        %v815 = vunpack.c.l.b16 %v528
        %v816 = vunpack.c.l.b16 %v529
        %v817 = vunpack.c.l.b16 %v530
        %v818 = vunpack.c.l.b16 %v531
        %v819 = vunpack.c.l.b16 %v532
        %v820 = vunpack.c.l.b16 %v533
        %v821 = vunpack.c.l.b16 %v534
        %v822 = vunpack.c.l.b16 %v535
        %v823 = vunpack.c.l.b16 %v536
        %v824 = vunpack.c.l.b16 %v537
        %v825 = vunpack.c.l.b16 %v538
        %v826 = vunpack.c.l.b16 %v539
        %v827 = vunpack.c.l.b16 %v540
        %v828 = vunpack.c.l.b16 %v541
        %v829 = vunpack.c.l.b16 %v542
        %v830 = vunpack.c.l.b16 %v543
        %v831 = vunpack.c.l.b16 %v544
        %v832 = vunpack.c.l.b16 %v545
        %v833 = vunpack.c.l.b16 %v546
        %v834 = vunpack.c.l.b16 %v547
        %v835 = vunpack.c.l.b16 %v548
        %v836 = vunpack.c.l.b16 %v549
        %v837 = vunpack.c.l.b16 %v550
        %v838 = vunpack.c.l.b16 %v551
        %v839 = vunpack.c.l.b16 %v552
        %v840 = vunpack.c.l.b16 %v553
        %v841 = vunpack.c.l.b16 %v554
        %v842 = vunpack.c.l.b16 %v555
        %v843 = vunpack.c.l.b16 %v556
        %v844 = vunpack.c.l.b16 %v557
        %v845 = vunpack.c.l.b16 %v558
        %v846 = vunpack.c.l.b16 %v559
        %v847 = vunpack.c.l.b16 %v560
        %v848 = vunpack.c.l.b16 %v561
        %v849 = vunpack.c.l.b16 %v562
        %v850 = vunpack.c.l.b16 %v563
        %v851 = vunpack.c.l.b16 %v564
        %v852 = vpack.c.b16 %v725, %v724
        %v853 = vpack.c.b16 %v727, %v726
        %v854 = vpack.c.b16 %v729, %v728
        %v855 = vpack.c.b16 %v731, %v730
        %v856 = vpack.c.b16 %v733, %v732
        %v857 = vpack.c.b16 %v735, %v734
        %v858 = vpack.c.b16 %v737, %v736
        %v859 = vpack.c.b16 %v739, %v738
        %v860 = vpack.c.b16 %v741, %v740
        %v861 = vpack.c.b16 %v743, %v742
        %v862 = vpack.c.b16 %v745, %v744
        %v863 = vpack.c.b16 %v747, %v746
        %v864 = vpack.c.b16 %v749, %v748
        %v865 = vpack.c.b16 %v751, %v750
        %v866 = vpack.c.b16 %v753, %v752
        %v867 = vpack.c.b16 %v755, %v754
        %v868 = vpack.c.b16 %v757, %v756
        %v869 = vpack.c.b16 %v759, %v758
        %v870 = vpack.c.b16 %v761, %v760
        %v871 = vpack.c.b16 %v763, %v762
        %v872 = vpack.c.b16 %v765, %v764
        %v873 = vpack.c.b16 %v767, %v766
        %v874 = vpack.c.b16 %v769, %v768
        %v875 = vpack.c.b16 %v771, %v770
        %v876 = vpack.c.b16 %v773, %v772
        %v877 = vpack.c.b16 %v775, %v774
        %v878 = vpack.c.b16 %v777, %v776
        %v879 = vpack.c.b16 %v779, %v778
        %v880 = vpack.c.b16 %v781, %v780
        %v881 = vpack.c.b16 %v783, %v782
        %v882 = vpack.c.b16 %v785, %v784
        %v883 = vpack.c.b16 %v787, %v786
        %v884 = vpack.c.b16 %v789, %v788
        %v885 = vpack.c.b16 %v791, %v790
        %v886 = vpack.c.b16 %v793, %v792
        %v887 = vpack.c.b16 %v795, %v794
        %v888 = vpack.c.b16 %v797, %v796
        %v889 = vpack.c.b16 %v799, %v798
        %v890 = vpack.c.b16 %v801, %v800
        %v891 = vpack.c.b16 %v803, %v802
        %v892 = vpack.c.b16 %v805, %v804
        %v893 = vpack.c.b16 %v807, %v806
        %v894 = vpack.c.b16 %v809, %v808
        %v895 = vpack.c.b16 %v811, %v810
        %v896 = vpack.c.b16 %v813, %v812
        %v897 = vpack.c.b16 %v815, %v814
        %v898 = vpack.c.b16 %v817, %v816
        %v899 = vpack.c.b16 %v819, %v818
        %v900 = vpack.c.b16 %v821, %v820
        %v901 = vpack.c.b16 %v823, %v822
        %v902 = vpack.c.b16 %v825, %v824
        %v903 = vpack.c.b16 %v827, %v826
        %v904 = vpack.c.b16 %v829, %v828
        %v905 = vpack.c.b16 %v831, %v830
        %v906 = vpack.c.b16 %v833, %v832
        %v907 = vpack.c.b16 %v835, %v834
        %v908 = vpack.c.b16 %v837, %v836
        %v909 = vpack.c.b16 %v839, %v838
        %v910 = vpack.c.b16 %v841, %v840
        %v911 = vpack.c.b16 %v843, %v842
        %v912 = vpack.c.b16 %v845, %v844
        %v913 = vpack.c.b16 %v847, %v846
        %v914 = vpack.c.b16 %v849, %v848
        %v915 = vpack.c.b16 %v851, %v850
        %980 = vmatprep.subr.bf16.mxu0 0
        %981 = vmatpush1.bf16.msra.mxu0 %v852
        %982 = vmatprep.subr.bf16.mxu0 0
        %983 = vmatpush1.bf16.msra.mxu0 %v853
        %984 = vmatprep.subr.bf16.mxu0 0
        %985 = vmatpush1.bf16.msra.mxu0 %v854
        %986 = vmatprep.subr.bf16.mxu0 0
        %987 = vmatpush1.bf16.msra.mxu0 %v855
        %988 = vmatprep.subr.bf16.mxu0 0
        %989 = vmatpush1.bf16.msra.mxu0 %v856
        %990 = vmatprep.subr.bf16.mxu0 0
        %991 = vmatpush1.bf16.msra.mxu0 %v857
        %992 = vmatprep.subr.bf16.mxu0 0
        %993 = vmatpush1.bf16.msra.mxu0 %v858
        %994 = vmatprep.subr.bf16.mxu0 0
        %995 = vmatpush1.bf16.msra.mxu0 %v859
        %996 = vmatprep.subr.bf16.mxu0 0
        %997 = vmatpush1.bf16.msra.mxu0 %v860
        %998 = vmatprep.subr.bf16.mxu0 0
        %999 = vmatpush1.bf16.msra.mxu0 %v861
        %1000 = vmatprep.subr.bf16.mxu0 0
        %1001 = vmatpush1.bf16.msra.mxu0 %v862
        %1002 = vmatprep.subr.bf16.mxu0 0
        %1003 = vmatpush1.bf16.msra.mxu0 %v863
        %1004 = vmatprep.subr.bf16.mxu0 0
        %1005 = vmatpush1.bf16.msra.mxu0 %v864
        %1006 = vmatprep.subr.bf16.mxu0 0
        %1007 = vmatpush1.bf16.msra.mxu0 %v865
        %1008 = vmatprep.subr.bf16.mxu0 0
        %1009 = vmatpush1.bf16.msra.mxu0 %v866
        %1010 = vmatprep.subr.bf16.mxu0 0
        %1011 = vmatpush1.bf16.msra.mxu0 %v867
        %1012 = vmatprep.mubr.bf16.mxu0 %v583
        %1013 = vmatmul.mubr.bf16.gmra.mrb[0].mxu0 %v582
        %v1014 = vpop.f32.mrb[0].mxu0
        %v1015 = vadd.f32 %v594, %v1014
        %v1016 = vpop.f32.mrb[0].mxu0
        %v1017 = vpop.f32.mrb[0].mxu0
        %v1018 = vadd.f32 %v594, %v1017
        %v1019 = vpop.f32.mrb[0].mxu0
        %1020 = vdwg.mxu0
        %1021 = vmatprep.subr.bf16.mxu0 0
        %1022 = vmatpush1.bf16.msra.mxu0 %v868
        %1023 = vmatprep.subr.bf16.mxu0 0
        %1024 = vmatpush1.bf16.msra.mxu0 %v869
        %1025 = vmatprep.subr.bf16.mxu0 0
        %1026 = vmatpush1.bf16.msra.mxu0 %v870
        %1027 = vmatprep.subr.bf16.mxu0 0
        %1028 = vmatpush1.bf16.msra.mxu0 %v871
        %1029 = vmatprep.subr.bf16.mxu0 0
        %1030 = vmatpush1.bf16.msra.mxu0 %v872
        %1031 = vmatprep.subr.bf16.mxu0 0
        %1032 = vmatpush1.bf16.msra.mxu0 %v873
        %1033 = vmatprep.subr.bf16.mxu0 0
        %1034 = vmatpush1.bf16.msra.mxu0 %v874
        %1035 = vmatprep.subr.bf16.mxu0 0
        %1036 = vmatpush1.bf16.msra.mxu0 %v875
        %1037 = vmatprep.subr.bf16.mxu0 0
        %1038 = vmatpush1.bf16.msra.mxu0 %v876
        %1039 = vmatprep.subr.bf16.mxu0 0
        %1040 = vmatpush1.bf16.msra.mxu0 %v877
        %1041 = vmatprep.subr.bf16.mxu0 0
        %1042 = vmatpush1.bf16.msra.mxu0 %v878
        %1043 = vmatprep.subr.bf16.mxu0 0
        %1044 = vmatpush1.bf16.msra.mxu0 %v879
        %1045 = vmatprep.subr.bf16.mxu0 0
        %1046 = vmatpush1.bf16.msra.mxu0 %v880
        %1047 = vmatprep.subr.bf16.mxu0 0
        %1048 = vmatpush1.bf16.msra.mxu0 %v881
        %1049 = vmatprep.subr.bf16.mxu0 0
        %1050 = vmatpush1.bf16.msra.mxu0 %v882
        %1051 = vmatprep.subr.bf16.mxu0 0
        %1052 = vmatpush1.bf16.msra.mxu0 %v883
        %1053 = vmatprep.mubr.bf16.mxu0 %v585
        %1054 = vmatmul.mubr.bf16.gmra.mrb[0].mxu0 %v584
        %v1055 = vpop.f32.mrb[0].mxu0
        %v1056 = vadd.f32 %v1015, %v1055
        %v1057 = vpop.f32.mrb[0].mxu0
        %v1058 = vpop.f32.mrb[0].mxu0
        %v1059 = vadd.f32 %v1018, %v1058
        %v1060 = vpop.f32.mrb[0].mxu0
        %1061 = vdwg.mxu0
        %1062 = vmatprep.subr.bf16.mxu0 0
        %1063 = vmatpush1.bf16.msra.mxu0 %v884
        %1064 = vmatprep.subr.bf16.mxu0 0
        %1065 = vmatpush1.bf16.msra.mxu0 %v885
        %1066 = vmatprep.subr.bf16.mxu0 0
        %1067 = vmatpush1.bf16.msra.mxu0 %v886
        %1068 = vmatprep.subr.bf16.mxu0 0
        %1069 = vmatpush1.bf16.msra.mxu0 %v887
        %1070 = vmatprep.subr.bf16.mxu0 0
        %1071 = vmatpush1.bf16.msra.mxu0 %v888
        %1072 = vmatprep.subr.bf16.mxu0 0
        %1073 = vmatpush1.bf16.msra.mxu0 %v889
        %1074 = vmatprep.subr.bf16.mxu0 0
        %1075 = vmatpush1.bf16.msra.mxu0 %v890
        %1076 = vmatprep.subr.bf16.mxu0 0
        %1077 = vmatpush1.bf16.msra.mxu0 %v891
        %1078 = vmatprep.subr.bf16.mxu0 0
        %1079 = vmatpush1.bf16.msra.mxu0 %v892
        %1080 = vmatprep.subr.bf16.mxu0 0
        %1081 = vmatpush1.bf16.msra.mxu0 %v893
        %1082 = vmatprep.subr.bf16.mxu0 0
        %1083 = vmatpush1.bf16.msra.mxu0 %v894
        %1084 = vmatprep.subr.bf16.mxu0 0
        %1085 = vmatpush1.bf16.msra.mxu0 %v895
        %1086 = vmatprep.subr.bf16.mxu0 0
        %1087 = vmatpush1.bf16.msra.mxu0 %v896
        %1088 = vmatprep.subr.bf16.mxu0 0
        %1089 = vmatpush1.bf16.msra.mxu0 %v897
        %1090 = vmatprep.subr.bf16.mxu0 0
        %1091 = vmatpush1.bf16.msra.mxu0 %v898
        %1092 = vmatprep.subr.bf16.mxu0 0
        %1093 = vmatpush1.bf16.msra.mxu0 %v899
        %1094 = vmatprep.mubr.bf16.mxu0 %v587
        %1095 = vmatmul.mubr.bf16.gmra.mrb[0].mxu0 %v586
        %v1096 = vpop.f32.mrb[0].mxu0
        %v1097 = vadd.f32 %v1056, %v1096
        %v1098 = vpop.f32.mrb[0].mxu0
        %v1099 = vpop.f32.mrb[0].mxu0
        %v1100 = vadd.f32 %v1059, %v1099
        %v1101 = vpop.f32.mrb[0].mxu0
        %1102 = vdwg.mxu0
        %1103 = vmatprep.subr.bf16.mxu0 0
        %1104 = vmatpush1.bf16.msra.mxu0 %v900
        %1105 = vmatprep.subr.bf16.mxu0 0
        %1106 = vmatpush1.bf16.msra.mxu0 %v901
        %1107 = vmatprep.subr.bf16.mxu0 0
        %1108 = vmatpush1.bf16.msra.mxu0 %v902
        %1109 = vmatprep.subr.bf16.mxu0 0
        %1110 = vmatpush1.bf16.msra.mxu0 %v903
        %1111 = vmatprep.subr.bf16.mxu0 0
        %1112 = vmatpush1.bf16.msra.mxu0 %v904
        %1113 = vmatprep.subr.bf16.mxu0 0
        %1114 = vmatpush1.bf16.msra.mxu0 %v905
        %1115 = vmatprep.subr.bf16.mxu0 0
        %1116 = vmatpush1.bf16.msra.mxu0 %v906
        %1117 = vmatprep.subr.bf16.mxu0 0
        %1118 = vmatpush1.bf16.msra.mxu0 %v907
        %1119 = vmatprep.subr.bf16.mxu0 0
        %1120 = vmatpush1.bf16.msra.mxu0 %v908
        %1121 = vmatprep.subr.bf16.mxu0 0
        %1122 = vmatpush1.bf16.msra.mxu0 %v909
        %1123 = vmatprep.subr.bf16.mxu0 0
        %1124 = vmatpush1.bf16.msra.mxu0 %v910
        %1125 = vmatprep.subr.bf16.mxu0 0
        %1126 = vmatpush1.bf16.msra.mxu0 %v911
        %1127 = vmatprep.subr.bf16.mxu0 0
        %1128 = vmatpush1.bf16.msra.mxu0 %v912
        %1129 = vmatprep.subr.bf16.mxu0 0
        %1130 = vmatpush1.bf16.msra.mxu0 %v913
        %1131 = vmatprep.subr.bf16.mxu0 0
        %1132 = vmatpush1.bf16.msra.mxu0 %v914
        %1133 = vmatprep.subr.bf16.mxu0 0
        %1134 = vmatpush1.bf16.msra.mxu0 %v915
        %1135 = vmatprep.mubr.bf16.mxu0 %v589
        %1136 = vmatmul.mubr.bf16.gmra.mrb[0].mxu0 %v588
        %v1137 = vpop.f32.mrb[0].mxu0
        %v1138 = vadd.f32 %v1097, %v1137
        %v1139 = vpop.f32.mrb[0].mxu0
        %v1140 = vpop.f32.mrb[0].mxu0
        %v1141 = vadd.f32 %v1100, %v1140
        %v1142 = vpop.f32.mrb[0].mxu0
        %1143 = vdwg.mxu0
        %v1144 = vmax.f32 %v1138, 0.0
        %v1145 = vmax.f32 %v1141, 0.0
        %v1146 = vld [vmem:[%s418] sm:$0xff]
        %v1147 = vld [vmem:[%s418 + $0x8] sm:$0xff]
        %v1148 = vld [vmem:[%s418 + $0x10] sm:$0xff]
        %v1149 = vld [vmem:[%s418 + $0x18] sm:$0xff]
        %v1150 = vld [vmem:[%s418 + $0x20] sm:$0xff]
        %v1151 = vld [vmem:[%s418 + $0x28] sm:$0xff]
        %v1152 = vld [vmem:[%s418 + $0x30] sm:$0xff]
        %v1153 = vld [vmem:[%s418 + $0x38] sm:$0xff]
        %v1154 = vpack.c.bf16 %v1146, %v1146
        %v1155 = vpack.c.bf16 %v1147, %v1147
        %v1156 = vpack.c.bf16 %v1148, %v1148
        %v1157 = vpack.c.bf16 %v1149, %v1149
        %v1158 = vpack.c.bf16 %v1150, %v1150
        %v1159 = vpack.c.bf16 %v1151, %v1151
        %v1160 = vpack.c.bf16 %v1152, %v1152
        %v1161 = vpack.c.bf16 %v1153, %v1153
        %1162 = vmatprep.subr.bf16.mxu0 0
        %1163 = vmatpush1.bf16.msra.mxu0 %v852
        %1164 = vmatprep.subr.bf16.mxu0 0
        %1165 = vmatpush1.bf16.msra.mxu0 %v853
        %1166 = vmatprep.subr.bf16.mxu0 0
        %1167 = vmatpush1.bf16.msra.mxu0 %v854
        %1168 = vmatprep.subr.bf16.mxu0 0
        %1169 = vmatpush1.bf16.msra.mxu0 %v855
        %1170 = vmatprep.subr.bf16.mxu0 0
        %1171 = vmatpush1.bf16.msra.mxu0 %v856
        %1172 = vmatprep.subr.bf16.mxu0 0
        %1173 = vmatpush1.bf16.msra.mxu0 %v857
        %1174 = vmatprep.subr.bf16.mxu0 0
        %1175 = vmatpush1.bf16.msra.mxu0 %v858
        %1176 = vmatprep.subr.bf16.mxu0 0
        %1177 = vmatpush1.bf16.msra.mxu0 %v859
        %1178 = vmatprep.subr.bf16.mxu0 0
        %1179 = vmatpush1.bf16.msra.mxu0 %v860
        %1180 = vmatprep.subr.bf16.mxu0 0
        %1181 = vmatpush1.bf16.msra.mxu0 %v861
        %1182 = vmatprep.subr.bf16.mxu0 0
        %1183 = vmatpush1.bf16.msra.mxu0 %v862
        %1184 = vmatprep.subr.bf16.mxu0 0
        %1185 = vmatpush1.bf16.msra.mxu0 %v863
        %1186 = vmatprep.subr.bf16.mxu0 0
        %1187 = vmatpush1.bf16.msra.mxu0 %v864
        %1188 = vmatprep.subr.bf16.mxu0 0
        %1189 = vmatpush1.bf16.msra.mxu0 %v865
        %1190 = vmatprep.subr.bf16.mxu0 0
        %1191 = vmatpush1.bf16.msra.mxu0 %v866
        %1192 = vmatprep.subr.bf16.mxu0 0
        %1193 = vmatpush1.bf16.msra.mxu0 %v867
        %1194 = vmatprep.mubr.bf16.mxu0 %v1155
        %1195 = vmatmul.mubr.bf16.gmra.mrb[0].mxu0 %v1154
        %v1196 = vpop.f32.mrb[0].mxu0
        %v1197 = vadd.f32 %v594, %v1196
        %v1198 = vpop.f32.mrb[0].mxu0
        %v1199 = vpop.f32.mrb[0].mxu0
        %v1200 = vpop.f32.mrb[0].mxu0
        %1201 = vdwg.mxu0
        %1202 = vmatprep.subr.bf16.mxu0 0
        %1203 = vmatpush1.bf16.msra.mxu0 %v868
        %1204 = vmatprep.subr.bf16.mxu0 0
        %1205 = vmatpush1.bf16.msra.mxu0 %v869
        %1206 = vmatprep.subr.bf16.mxu0 0
        %1207 = vmatpush1.bf16.msra.mxu0 %v870
        %1208 = vmatprep.subr.bf16.mxu0 0
        %1209 = vmatpush1.bf16.msra.mxu0 %v871
        %1210 = vmatprep.subr.bf16.mxu0 0
        %1211 = vmatpush1.bf16.msra.mxu0 %v872
        %1212 = vmatprep.subr.bf16.mxu0 0
        %1213 = vmatpush1.bf16.msra.mxu0 %v873
        %1214 = vmatprep.subr.bf16.mxu0 0
        %1215 = vmatpush1.bf16.msra.mxu0 %v874
        %1216 = vmatprep.subr.bf16.mxu0 0
        %1217 = vmatpush1.bf16.msra.mxu0 %v875
        %1218 = vmatprep.subr.bf16.mxu0 0
        %1219 = vmatpush1.bf16.msra.mxu0 %v876
        %1220 = vmatprep.subr.bf16.mxu0 0
        %1221 = vmatpush1.bf16.msra.mxu0 %v877
        %1222 = vmatprep.subr.bf16.mxu0 0
        %1223 = vmatpush1.bf16.msra.mxu0 %v878
        %1224 = vmatprep.subr.bf16.mxu0 0
        %1225 = vmatpush1.bf16.msra.mxu0 %v879
        %1226 = vmatprep.subr.bf16.mxu0 0
        %1227 = vmatpush1.bf16.msra.mxu0 %v880
        %1228 = vmatprep.subr.bf16.mxu0 0
        %1229 = vmatpush1.bf16.msra.mxu0 %v881
        %1230 = vmatprep.subr.bf16.mxu0 0
        %1231 = vmatpush1.bf16.msra.mxu0 %v882
        %1232 = vmatprep.subr.bf16.mxu0 0
        %1233 = vmatpush1.bf16.msra.mxu0 %v883
        %1234 = vmatprep.mubr.bf16.mxu0 %v1157
        %1235 = vmatmul.mubr.bf16.gmra.mrb[0].mxu0 %v1156
        %v1236 = vpop.f32.mrb[0].mxu0
        %v1237 = vadd.f32 %v1197, %v1236
        %v1238 = vpop.f32.mrb[0].mxu0
        %v1239 = vpop.f32.mrb[0].mxu0
        %v1240 = vpop.f32.mrb[0].mxu0
        %1241 = vdwg.mxu0
        %1242 = vmatprep.subr.bf16.mxu0 0
        %1243 = vmatpush1.bf16.msra.mxu0 %v884
        %1244 = vmatprep.subr.bf16.mxu0 0
        %1245 = vmatpush1.bf16.msra.mxu0 %v885
        %1246 = vmatprep.subr.bf16.mxu0 0
        %1247 = vmatpush1.bf16.msra.mxu0 %v886
        %1248 = vmatprep.subr.bf16.mxu0 0
        %1249 = vmatpush1.bf16.msra.mxu0 %v887
        %1250 = vmatprep.subr.bf16.mxu0 0
        %1251 = vmatpush1.bf16.msra.mxu0 %v888
        %1252 = vmatprep.subr.bf16.mxu0 0
        %1253 = vmatpush1.bf16.msra.mxu0 %v889
        %1254 = vmatprep.subr.bf16.mxu0 0
        %1255 = vmatpush1.bf16.msra.mxu0 %v890
        %1256 = vmatprep.subr.bf16.mxu0 0
        %1257 = vmatpush1.bf16.msra.mxu0 %v891
        %1258 = vmatprep.subr.bf16.mxu0 0
        %1259 = vmatpush1.bf16.msra.mxu0 %v892
        %1260 = vmatprep.subr.bf16.mxu0 0
        %1261 = vmatpush1.bf16.msra.mxu0 %v893
        %1262 = vmatprep.subr.bf16.mxu0 0
        %1263 = vmatpush1.bf16.msra.mxu0 %v894
        %1264 = vmatprep.subr.bf16.mxu0 0
        %1265 = vmatpush1.bf16.msra.mxu0 %v895
        %1266 = vmatprep.subr.bf16.mxu0 0
        %1267 = vmatpush1.bf16.msra.mxu0 %v896
        %1268 = vmatprep.subr.bf16.mxu0 0
        %1269 = vmatpush1.bf16.msra.mxu0 %v897
        %1270 = vmatprep.subr.bf16.mxu0 0
        %1271 = vmatpush1.bf16.msra.mxu0 %v898
        %1272 = vmatprep.subr.bf16.mxu0 0
        %1273 = vmatpush1.bf16.msra.mxu0 %v899
        %1274 = vmatprep.mubr.bf16.mxu0 %v1159
        %1275 = vmatmul.mubr.bf16.gmra.mrb[0].mxu0 %v1158
        %v1276 = vpop.f32.mrb[0].mxu0
        %v1277 = vadd.f32 %v1237, %v1276
        %v1278 = vpop.f32.mrb[0].mxu0
        %v1279 = vpop.f32.mrb[0].mxu0
        %v1280 = vpop.f32.mrb[0].mxu0
        %1281 = vdwg.mxu0
        %1282 = vmatprep.subr.bf16.mxu0 0
        %1283 = vmatpush1.bf16.msra.mxu0 %v900
        %1284 = vmatprep.subr.bf16.mxu0 0
        %1285 = vmatpush1.bf16.msra.mxu0 %v901
        %1286 = vmatprep.subr.bf16.mxu0 0
        %1287 = vmatpush1.bf16.msra.mxu0 %v902
        %1288 = vmatprep.subr.bf16.mxu0 0
        %1289 = vmatpush1.bf16.msra.mxu0 %v903
        %1290 = vmatprep.subr.bf16.mxu0 0
        %1291 = vmatpush1.bf16.msra.mxu0 %v904
        %1292 = vmatprep.subr.bf16.mxu0 0
        %1293 = vmatpush1.bf16.msra.mxu0 %v905
        %1294 = vmatprep.subr.bf16.mxu0 0
        %1295 = vmatpush1.bf16.msra.mxu0 %v906
        %1296 = vmatprep.subr.bf16.mxu0 0
        %1297 = vmatpush1.bf16.msra.mxu0 %v907
        %1298 = vmatprep.subr.bf16.mxu0 0
        %1299 = vmatpush1.bf16.msra.mxu0 %v908
        %1300 = vmatprep.subr.bf16.mxu0 0
        %1301 = vmatpush1.bf16.msra.mxu0 %v909
        %1302 = vmatprep.subr.bf16.mxu0 0
        %1303 = vmatpush1.bf16.msra.mxu0 %v910
        %1304 = vmatprep.subr.bf16.mxu0 0
        %1305 = vmatpush1.bf16.msra.mxu0 %v911
        %1306 = vmatprep.subr.bf16.mxu0 0
        %1307 = vmatpush1.bf16.msra.mxu0 %v912
        %1308 = vmatprep.subr.bf16.mxu0 0
        %1309 = vmatpush1.bf16.msra.mxu0 %v913
        %1310 = vmatprep.subr.bf16.mxu0 0
        %1311 = vmatpush1.bf16.msra.mxu0 %v914
        %1312 = vmatprep.subr.bf16.mxu0 0
        %1313 = vmatpush1.bf16.msra.mxu0 %v915
        %1314 = vmatprep.mubr.bf16.mxu0 %v1161
        %1315 = vmatmul.mubr.bf16.gmra.mrb[0].mxu0 %v1160
        %v1316 = vpop.f32.mrb[0].mxu0
        %v1317 = vadd.f32 %v1277, %v1316
        %v1318 = vpop.f32.mrb[0].mxu0
        %v1319 = vpop.f32.mrb[0].mxu0
        %v1320 = vpop.f32.mrb[0].mxu0
        %1321 = vdwg.mxu0
        %v1322 = vmax.f32 %v1317, 0.0
        %v1323 = vlaneseq
        %v1324 = vand.u32 %v1323, 127
        %vm1325 = vcmp.lt.s32.totalorder %v1324, 16
        %v1326 = vld [vmem:[%s423] sm:$0xff]
        %v1327 = vld [vmem:[%s423 + $0x8] sm:$0xff]
        %v1328 = vld [vmem:[%s6] sm:$0xff]
        %v1329 = vld [vmem:[%s6 + $0x8] sm:$0xff]
        %v1330 = vld [vmem:[%s6 + $0x10] sm:$0xff]
        %v1331 = vld [vmem:[%s6 + $0x18] sm:$0xff]
        %v1332 = vld [vmem:[%s6 + $0x20] sm:$0xff]
        %v1333 = vld [vmem:[%s6 + $0x28] sm:$0xff]
        %v1334 = vld [vmem:[%s6 + $0x30] sm:$0xff]
        %v1335 = vld [vmem:[%s6 + $0x38] sm:$0xff]
        %v1336 = vld [vmem:[%s6 + $0x40] sm:$0xff]
        %v1337 = vld [vmem:[%s6 + $0x48] sm:$0xff]
        %v1338 = vld [vmem:[%s6 + $0x50] sm:$0xff]
        %v1339 = vld [vmem:[%s6 + $0x58] sm:$0xff]
        %v1340 = vld [vmem:[%s6 + $0x60] sm:$0xff]
        %v1341 = vld [vmem:[%s6 + $0x68] sm:$0xff]
        %v1342 = vld [vmem:[%s6 + $0x70] sm:$0xff]
        %v1343 = vld [vmem:[%s6 + $0x78] sm:$0xff]
        %v1344 = vld [vmem:[%s7] sm:$0x1]
        %v1345 = vpack.c.bf16 %v1144, %v1144
        %v1346 = vpack.c.bf16 %v1329, %v1328
        %v1347 = vpack.c.bf16 %v1331, %v1330
        %v1348 = vpack.c.bf16 %v1333, %v1332
        %v1349 = vpack.c.bf16 %v1335, %v1334
        %v1350 = vpack.c.bf16 %v1337, %v1336
        %v1351 = vpack.c.bf16 %v1339, %v1338
        %v1352 = vpack.c.bf16 %v1341, %v1340
        %v1353 = vpack.c.bf16 %v1343, %v1342
        %v1355 = vlaneseq
        %v1356 = vshrl.u32 %v1355, 7
        %v1357 = vsub.s32 0, %v1356
        %v1358 = vrot.slane %v1344, %v1357
        %1360 = vmatprep.subr.bf16.mxu0 0
        %1361 = vmatpush1.bf16.msra.mxu0 %v1346
        %1362 = vmatprep.subr.bf16.mxu0 0
        %1363 = vmatpush1.bf16.msra.mxu0 %v1347
        %1364 = vmatprep.subr.bf16.mxu0 0
        %1365 = vmatpush1.bf16.msra.mxu0 %v1348
        %1366 = vmatprep.subr.bf16.mxu0 0
        %1367 = vmatpush1.bf16.msra.mxu0 %v1349
        %1368 = vmatprep.subr.bf16.mxu0 0
        %1369 = vmatpush1.bf16.msra.mxu0 %v1350
        %1370 = vmatprep.subr.bf16.mxu0 0
        %1371 = vmatpush1.bf16.msra.mxu0 %v1351
        %1372 = vmatprep.subr.bf16.mxu0 0
        %1373 = vmatpush1.bf16.msra.mxu0 %v1352
        %1374 = vmatprep.subr.bf16.mxu0 0
        %1375 = vmatpush1.bf16.msra.mxu0 %v1353
        %1376 = vmatprep.subr.bf16.mxu0 0
        %1377 = vmatpush1.bf16.msra.mxu0 0
        %1378 = vmatprep.subr.bf16.mxu0 0
        %1379 = vmatpush1.bf16.msra.mxu0 0
        %1380 = vmatprep.subr.bf16.mxu0 0
        %1381 = vmatpush1.bf16.msra.mxu0 0
        %1382 = vmatprep.subr.bf16.mxu0 0
        %1383 = vmatpush1.bf16.msra.mxu0 0
        %1384 = vmatprep.subr.bf16.mxu0 0
        %1385 = vmatpush1.bf16.msra.mxu0 0
        %1386 = vmatprep.subr.bf16.mxu0 0
        %1387 = vmatpush1.bf16.msra.mxu0 0
        %1388 = vmatprep.subr.bf16.mxu0 0
        %1389 = vmatpush1.bf16.msra.mxu0 0
        %1390 = vmatprep.subr.bf16.mxu0 0
        %1391 = vmatpush1.bf16.msra.mxu0 0
        %1392 = vmatprep.mubr.bf16.mxu0 0
        %1393 = vmatmul.mubr.bf16.gmra.mrb[0].mxu0 %v1345
        %v1394 = vpop.f32.mrb[0].mxu0
        %v1395 = vadd.f32 %v1358, %v1394
        %v1396 = vpop.f32.mrb[0].mxu0
        %v1397 = vpop.f32.mrb[0].mxu0
        %v1398 = vpop.f32.mrb[0].mxu0
        %1399 = vdwg.mxu0
        %v1400 = vsel %vm1325, %v1395, -1e+30
        %1401 = vmax.xlane.f32.xlu0 %v1400
        %v1402 = vpop.xlane.xlu0 %1401
        %v1403 = vsub.f32 %v1400, %v1402
        %v1404 = vmul.f32 %v1403, 1.442695
        %v1405 = vpow.pop %v1404
        %1406 = vadd.xlane.f32.xlu0 %v1405
        %v1407 = vpop.xlane.xlu0 %1406
        %v1408 = vrcp.pop %v1407
        %v1409 = vmul.f32 %v1405, %v1408
        %1410 = vset.pattern.permute.xlu0 0
        %1411 = vperm.xlu0 %1410, %v1326
        %v1412 = vpop.permute.xlu0 %1411
        %vm1413 = vcmp.eq.s32.totalorder %v1324, %v1412
        %v1414 = vsel %vm1413, 1, 0
        %v1415 = vcvt.s32.f32 %v1414
        %v1416 = vsub.f32 %v1409, %v1415
        %v1417 = vmul.f32 %v1416, 0.125
        %v1418 = vpack.c.bf16 %v1417, %v1417
        %1419 = vxpose.xlu0.c.b16.start [1/8] %v1345, 128
        %1420 = vxpose.xlu0.c.b16.cont [2/8] 0, 128
        %1421 = vxpose.xlu0.c.b16.cont [3/8] 0, 128
        %1422 = vxpose.xlu0.c.b16.cont [4/8] 0, 128
        %1423 = vxpose.xlu0.c.b16.cont [5/8] 0, 128
        %1424 = vxpose.xlu0.c.b16.cont [6/8] 0, 128
        %1425 = vxpose.xlu0.c.b16.cont [7/8] 0, 128
        %1426 = vxpose.xlu0.c.b16.end [8/8] 0, 128
        %v1427 = vpop.trf.xlu0
        %v1428 = vpop.trf.xlu0
        %v1429 = vpop.trf.xlu0
        %v1430 = vpop.trf.xlu0
        %v1431 = vpop.trf.xlu0
        %v1432 = vpop.trf.xlu0
        %v1433 = vpop.trf.xlu0
        %v1434 = vpop.trf.xlu0
        %vm1435 = vcmask 64512
        %v1437 = vsel %vm1435, %v1427, 0
        %v1440 = vsel %vm1435, %v1428, 0
        %v1443 = vsel %vm1435, %v1429, 0
        %v1446 = vsel %vm1435, %v1430, 0
        %v1449 = vsel %vm1435, %v1431, 0
        %v1452 = vsel %vm1435, %v1432, 0
        %v1455 = vsel %vm1435, %v1433, 0
        %v1458 = vsel %vm1435, %v1434, 0
        %vm1460 = vcmask 1043456
        %v1462 = vsel %vm1460, %v1418, 0
        %1464 = vmatprep.subr.bf16.mxu0 0
        %1465 = vmatpush1.bf16.msra.mxu0 %v1462
        %1466 = vmatprep.subr.bf16.mxu0 0
        %1467 = vmatpush1.bf16.msra.mxu0 0
        %1468 = vmatprep.subr.bf16.mxu0 0
        %1469 = vmatpush1.bf16.msra.mxu0 0
        %1470 = vmatprep.subr.bf16.mxu0 0
        %1471 = vmatpush1.bf16.msra.mxu0 0
        %1472 = vmatprep.subr.bf16.mxu0 0
        %1473 = vmatpush1.bf16.msra.mxu0 0
        %1474 = vmatprep.subr.bf16.mxu0 0
        %1475 = vmatpush1.bf16.msra.mxu0 0
        %1476 = vmatprep.subr.bf16.mxu0 0
        %1477 = vmatpush1.bf16.msra.mxu0 0
        %1478 = vmatprep.subr.bf16.mxu0 0
        %1479 = vmatpush1.bf16.msra.mxu0 0
        %1480 = vmatprep.subr.bf16.mxu0 0
        %1481 = vmatpush1.bf16.msra.mxu0 0
        %1482 = vmatprep.subr.bf16.mxu0 0
        %1483 = vmatpush1.bf16.msra.mxu0 0
        %1484 = vmatprep.subr.bf16.mxu0 0
        %1485 = vmatpush1.bf16.msra.mxu0 0
        %1486 = vmatprep.subr.bf16.mxu0 0
        %1487 = vmatpush1.bf16.msra.mxu0 0
        %1488 = vmatprep.subr.bf16.mxu0 0
        %1489 = vmatpush1.bf16.msra.mxu0 0
        %1490 = vmatprep.subr.bf16.mxu0 0
        %1491 = vmatpush1.bf16.msra.mxu0 0
        %1492 = vmatprep.subr.bf16.mxu0 0
        %1493 = vmatpush1.bf16.msra.mxu0 0
        %1494 = vmatprep.subr.bf16.mxu0 0
        %1495 = vmatpush1.bf16.msra.mxu0 0
        %1496 = vmatprep.mubr.bf16.mxu0 0
        %1497 = vmatmul.mubr.bf16.gmra.mrb[0].mxu0 %v1437
        %v1498 = vpop.f32.mrb[0].mxu0
        %v1499 = vadd.f32 0.0, %v1498
        %v1500 = vpop.f32.mrb[0].mxu0
        %v1501 = vpop.f32.mrb[0].mxu0
        %v1502 = vadd.f32 0.0, %v1501
        %v1503 = vpop.f32.mrb[0].mxu0
        %1504 = vmatprep.mubr.bf16.mxu0 0
        %1505 = vmatmul.mubr.bf16.gmra.mrb[0].mxu0 %v1440
        %v1506 = vpop.f32.mrb[0].mxu0
        %v1507 = vadd.f32 0.0, %v1506
        %v1508 = vpop.f32.mrb[0].mxu0
        %v1509 = vpop.f32.mrb[0].mxu0
        %v1510 = vadd.f32 0.0, %v1509
        %v1511 = vpop.f32.mrb[0].mxu0
        %1512 = vmatprep.mubr.bf16.mxu0 0
        %1513 = vmatmul.mubr.bf16.gmra.mrb[0].mxu0 %v1443
        %v1514 = vpop.f32.mrb[0].mxu0
        %v1515 = vadd.f32 0.0, %v1514
        %v1516 = vpop.f32.mrb[0].mxu0
        %v1517 = vpop.f32.mrb[0].mxu0
        %v1518 = vadd.f32 0.0, %v1517
        %v1519 = vpop.f32.mrb[0].mxu0
        %1520 = vmatprep.mubr.bf16.mxu0 0
        %1521 = vmatmul.mubr.bf16.gmra.mrb[0].mxu0 %v1446
        %v1522 = vpop.f32.mrb[0].mxu0
        %v1523 = vadd.f32 0.0, %v1522
        %v1524 = vpop.f32.mrb[0].mxu0
        %v1525 = vpop.f32.mrb[0].mxu0
        %v1526 = vadd.f32 0.0, %v1525
        %v1527 = vpop.f32.mrb[0].mxu0
        %1528 = vmatprep.mubr.bf16.mxu0 0
        %1529 = vmatmul.mubr.bf16.gmra.mrb[0].mxu0 %v1449
        %v1530 = vpop.f32.mrb[0].mxu0
        %v1531 = vadd.f32 0.0, %v1530
        %v1532 = vpop.f32.mrb[0].mxu0
        %v1533 = vpop.f32.mrb[0].mxu0
        %v1534 = vadd.f32 0.0, %v1533
        %v1535 = vpop.f32.mrb[0].mxu0
        %1536 = vmatprep.mubr.bf16.mxu0 0
        %1537 = vmatmul.mubr.bf16.gmra.mrb[0].mxu0 %v1452
        %v1538 = vpop.f32.mrb[0].mxu0
        %v1539 = vadd.f32 0.0, %v1538
        %v1540 = vpop.f32.mrb[0].mxu0
        %v1541 = vpop.f32.mrb[0].mxu0
        %v1542 = vadd.f32 0.0, %v1541
        %v1543 = vpop.f32.mrb[0].mxu0
        %1544 = vmatprep.mubr.bf16.mxu0 0
        %1545 = vmatmul.mubr.bf16.gmra.mrb[0].mxu0 %v1455
        %v1546 = vpop.f32.mrb[0].mxu0
        %v1547 = vadd.f32 0.0, %v1546
        %v1548 = vpop.f32.mrb[0].mxu0
        %v1549 = vpop.f32.mrb[0].mxu0
        %v1550 = vadd.f32 0.0, %v1549
        %v1551 = vpop.f32.mrb[0].mxu0
        %1552 = vmatprep.mubr.bf16.mxu0 0
        %1553 = vmatmul.mubr.bf16.gmra.mrb[0].mxu0 %v1458
        %v1554 = vpop.f32.mrb[0].mxu0
        %v1555 = vadd.f32 0.0, %v1554
        %v1556 = vpop.f32.mrb[0].mxu0
        %v1557 = vpop.f32.mrb[0].mxu0
        %v1558 = vadd.f32 0.0, %v1557
        %v1559 = vpop.f32.mrb[0].mxu0
        %1560 = vdwg.mxu0
        %v1561 = vrot.slane %v1417, 4
        %v1562 = vadd.f32 %v1417, %v1561
        %v1563 = vrot.slane %v1562, 2
        %v1564 = vadd.f32 %v1562, %v1563
        %v1565 = vrot.slane %v1564, 1
        %v1566 = vadd.f32 %v1564, %v1565
        %v1567 = vmul.f32 %v1499, 0.1
        %v1568 = vmul.f32 %v1502, 0.1
        %v1569 = vmul.f32 %v1507, 0.1
        %v1570 = vmul.f32 %v1510, 0.1
        %v1571 = vmul.f32 %v1515, 0.1
        %v1572 = vmul.f32 %v1518, 0.1
        %v1573 = vmul.f32 %v1523, 0.1
        %v1574 = vmul.f32 %v1526, 0.1
        %v1575 = vmul.f32 %v1531, 0.1
        %v1576 = vmul.f32 %v1534, 0.1
        %v1577 = vmul.f32 %v1539, 0.1
        %v1578 = vmul.f32 %v1542, 0.1
        %v1579 = vmul.f32 %v1547, 0.1
        %v1580 = vmul.f32 %v1550, 0.1
        %v1581 = vmul.f32 %v1555, 0.1
        %v1582 = vmul.f32 %v1558, 0.1
        %v1583 = vsub.f32 %v1328, %v1567
        %v1584 = vsub.f32 %v1329, %v1568
        %v1585 = vsub.f32 %v1330, %v1569
        %v1586 = vsub.f32 %v1331, %v1570
        %v1587 = vsub.f32 %v1332, %v1571
        %v1588 = vsub.f32 %v1333, %v1572
        %v1589 = vsub.f32 %v1334, %v1573
        %v1590 = vsub.f32 %v1335, %v1574
        %v1591 = vsub.f32 %v1336, %v1575
        %v1592 = vsub.f32 %v1337, %v1576
        %v1593 = vsub.f32 %v1338, %v1577
        %v1594 = vsub.f32 %v1339, %v1578
        %v1595 = vsub.f32 %v1340, %v1579
        %v1596 = vsub.f32 %v1341, %v1580
        %v1597 = vsub.f32 %v1342, %v1581
        %v1598 = vsub.f32 %v1343, %v1582
        %v1599 = vmul.f32 %v1566, 0.1
        %v1600 = vsub.f32 %v1344, %v1599
        %v1601 = vpack.c.bf16 %v1584, %v1583
        %v1602 = vpack.c.bf16 %v1586, %v1585
        %v1603 = vpack.c.bf16 %v1588, %v1587
        %v1604 = vpack.c.bf16 %v1590, %v1589
        %v1605 = vpack.c.bf16 %v1592, %v1591
        %v1606 = vpack.c.bf16 %v1594, %v1593
        %v1607 = vpack.c.bf16 %v1596, %v1595
        %v1608 = vpack.c.bf16 %v1598, %v1597
        %v1610 = vlaneseq
        %v1611 = vshrl.u32 %v1610, 7
        %v1612 = vsub.s32 0, %v1611
        %v1613 = vrot.slane %v1600, %v1612
        %1615 = vmatprep.subr.bf16.mxu0 0
        %1616 = vmatpush1.bf16.msra.mxu0 %v1601
        %1617 = vmatprep.subr.bf16.mxu0 0
        %1618 = vmatpush1.bf16.msra.mxu0 %v1602
        %1619 = vmatprep.subr.bf16.mxu0 0
        %1620 = vmatpush1.bf16.msra.mxu0 %v1603
        %1621 = vmatprep.subr.bf16.mxu0 0
        %1622 = vmatpush1.bf16.msra.mxu0 %v1604
        %1623 = vmatprep.subr.bf16.mxu0 0
        %1624 = vmatpush1.bf16.msra.mxu0 %v1605
        %1625 = vmatprep.subr.bf16.mxu0 0
        %1626 = vmatpush1.bf16.msra.mxu0 %v1606
        %1627 = vmatprep.subr.bf16.mxu0 0
        %1628 = vmatpush1.bf16.msra.mxu0 %v1607
        %1629 = vmatprep.subr.bf16.mxu0 0
        %1630 = vmatpush1.bf16.msra.mxu0 %v1608
        %1631 = vmatprep.subr.bf16.mxu0 0
        %1632 = vmatpush1.bf16.msra.mxu0 0
        %1633 = vmatprep.subr.bf16.mxu0 0
        %1634 = vmatpush1.bf16.msra.mxu0 0
        %1635 = vmatprep.subr.bf16.mxu0 0
        %1636 = vmatpush1.bf16.msra.mxu0 0
        %1637 = vmatprep.subr.bf16.mxu0 0
        %1638 = vmatpush1.bf16.msra.mxu0 0
        %1639 = vmatprep.subr.bf16.mxu0 0
        %1640 = vmatpush1.bf16.msra.mxu0 0
        %1641 = vmatprep.subr.bf16.mxu0 0
        %1642 = vmatpush1.bf16.msra.mxu0 0
        %1643 = vmatprep.subr.bf16.mxu0 0
        %1644 = vmatpush1.bf16.msra.mxu0 0
        %1645 = vmatprep.subr.bf16.mxu0 0
        %1646 = vmatpush1.bf16.msra.mxu0 0
        %1647 = vmatprep.mubr.bf16.mxu0 0
        %1648 = vmatmul.mubr.bf16.gmra.mrb[0].mxu0 %v1345
        %v1649 = vpop.f32.mrb[0].mxu0
        %v1650 = vadd.f32 %v1613, %v1649
        %v1651 = vpop.f32.mrb[0].mxu0
        %v1652 = vpop.f32.mrb[0].mxu0
        %v1653 = vpop.f32.mrb[0].mxu0
        %1654 = vdwg.mxu0
        %v1655 = vsel %vm1325, %v1650, -1e+30
        %1656 = vmax.xlane.f32.xlu0 %v1655
        %v1657 = vpop.xlane.xlu0 %1656
        %v1658 = vsub.f32 %v1655, %v1657
        %v1659 = vmul.f32 %v1658, 1.442695
        %v1660 = vpow.pop %v1659
        %1661 = vadd.xlane.f32.xlu0 %v1660
        %v1662 = vpop.xlane.xlu0 %1661
        %v1663 = vrcp.pop %v1662
        %v1664 = vmul.f32 %v1660, %v1663
        %v1665 = vsub.f32 %v1664, %v1415
        %v1666 = vmul.f32 %v1665, 0.125
        %v1667 = vpack.c.bf16 %v1666, %v1666
        %v1669 = vsel %vm1460, %v1667, 0
        %1671 = vmatprep.subr.bf16.mxu0 0
        %1672 = vmatpush1.bf16.msra.mxu0 %v1669
        %1673 = vmatprep.subr.bf16.mxu0 0
        %1674 = vmatpush1.bf16.msra.mxu0 0
        %1675 = vmatprep.subr.bf16.mxu0 0
        %1676 = vmatpush1.bf16.msra.mxu0 0
        %1677 = vmatprep.subr.bf16.mxu0 0
        %1678 = vmatpush1.bf16.msra.mxu0 0
        %1679 = vmatprep.subr.bf16.mxu0 0
        %1680 = vmatpush1.bf16.msra.mxu0 0
        %1681 = vmatprep.subr.bf16.mxu0 0
        %1682 = vmatpush1.bf16.msra.mxu0 0
        %1683 = vmatprep.subr.bf16.mxu0 0
        %1684 = vmatpush1.bf16.msra.mxu0 0
        %1685 = vmatprep.subr.bf16.mxu0 0
        %1686 = vmatpush1.bf16.msra.mxu0 0
        %1687 = vmatprep.subr.bf16.mxu0 0
        %1688 = vmatpush1.bf16.msra.mxu0 0
        %1689 = vmatprep.subr.bf16.mxu0 0
        %1690 = vmatpush1.bf16.msra.mxu0 0
        %1691 = vmatprep.subr.bf16.mxu0 0
        %1692 = vmatpush1.bf16.msra.mxu0 0
        %1693 = vmatprep.subr.bf16.mxu0 0
        %1694 = vmatpush1.bf16.msra.mxu0 0
        %1695 = vmatprep.subr.bf16.mxu0 0
        %1696 = vmatpush1.bf16.msra.mxu0 0
        %1697 = vmatprep.subr.bf16.mxu0 0
        %1698 = vmatpush1.bf16.msra.mxu0 0
        %1699 = vmatprep.subr.bf16.mxu0 0
        %1700 = vmatpush1.bf16.msra.mxu0 0
        %1701 = vmatprep.subr.bf16.mxu0 0
        %1702 = vmatpush1.bf16.msra.mxu0 0
        %1703 = vmatprep.mubr.bf16.mxu0 0
        %1704 = vmatmul.mubr.bf16.gmra.mrb[0].mxu0 %v1437
        %v1705 = vpop.f32.mrb[0].mxu0
        %v1706 = vadd.f32 0.0, %v1705
        %v1707 = vpop.f32.mrb[0].mxu0
        %v1708 = vpop.f32.mrb[0].mxu0
        %v1709 = vadd.f32 0.0, %v1708
        %v1710 = vpop.f32.mrb[0].mxu0
        %1711 = vmatprep.mubr.bf16.mxu0 0
        %1712 = vmatmul.mubr.bf16.gmra.mrb[0].mxu0 %v1440
        %v1713 = vpop.f32.mrb[0].mxu0
        %v1714 = vadd.f32 0.0, %v1713
        %v1715 = vpop.f32.mrb[0].mxu0
        %v1716 = vpop.f32.mrb[0].mxu0
        %v1717 = vadd.f32 0.0, %v1716
        %v1718 = vpop.f32.mrb[0].mxu0
        %1719 = vmatprep.mubr.bf16.mxu0 0
        %1720 = vmatmul.mubr.bf16.gmra.mrb[0].mxu0 %v1443
        %v1721 = vpop.f32.mrb[0].mxu0
        %v1722 = vadd.f32 0.0, %v1721
        %v1723 = vpop.f32.mrb[0].mxu0
        %v1724 = vpop.f32.mrb[0].mxu0
        %v1725 = vadd.f32 0.0, %v1724
        %v1726 = vpop.f32.mrb[0].mxu0
        %1727 = vmatprep.mubr.bf16.mxu0 0
        %1728 = vmatmul.mubr.bf16.gmra.mrb[0].mxu0 %v1446
        %v1729 = vpop.f32.mrb[0].mxu0
        %v1730 = vadd.f32 0.0, %v1729
        %v1731 = vpop.f32.mrb[0].mxu0
        %v1732 = vpop.f32.mrb[0].mxu0
        %v1733 = vadd.f32 0.0, %v1732
        %v1734 = vpop.f32.mrb[0].mxu0
        %1735 = vmatprep.mubr.bf16.mxu0 0
        %1736 = vmatmul.mubr.bf16.gmra.mrb[0].mxu0 %v1449
        %v1737 = vpop.f32.mrb[0].mxu0
        %v1738 = vadd.f32 0.0, %v1737
        %v1739 = vpop.f32.mrb[0].mxu0
        %v1740 = vpop.f32.mrb[0].mxu0
        %v1741 = vadd.f32 0.0, %v1740
        %v1742 = vpop.f32.mrb[0].mxu0
        %1743 = vmatprep.mubr.bf16.mxu0 0
        %1744 = vmatmul.mubr.bf16.gmra.mrb[0].mxu0 %v1452
        %v1745 = vpop.f32.mrb[0].mxu0
        %v1746 = vadd.f32 0.0, %v1745
        %v1747 = vpop.f32.mrb[0].mxu0
        %v1748 = vpop.f32.mrb[0].mxu0
        %v1749 = vadd.f32 0.0, %v1748
        %v1750 = vpop.f32.mrb[0].mxu0
        %1751 = vmatprep.mubr.bf16.mxu0 0
        %1752 = vmatmul.mubr.bf16.gmra.mrb[0].mxu0 %v1455
        %v1753 = vpop.f32.mrb[0].mxu0
        %v1754 = vadd.f32 0.0, %v1753
        %v1755 = vpop.f32.mrb[0].mxu0
        %v1756 = vpop.f32.mrb[0].mxu0
        %v1757 = vadd.f32 0.0, %v1756
        %v1758 = vpop.f32.mrb[0].mxu0
        %1759 = vmatprep.mubr.bf16.mxu0 0
        %1760 = vmatmul.mubr.bf16.gmra.mrb[0].mxu0 %v1458
        %v1761 = vpop.f32.mrb[0].mxu0
        %v1762 = vadd.f32 0.0, %v1761
        %v1763 = vpop.f32.mrb[0].mxu0
        %v1764 = vpop.f32.mrb[0].mxu0
        %v1765 = vadd.f32 0.0, %v1764
        %v1766 = vpop.f32.mrb[0].mxu0
        %1767 = vdwg.mxu0
        %v1768 = vrot.slane %v1666, 4
        %v1769 = vadd.f32 %v1666, %v1768
        %v1770 = vrot.slane %v1769, 2
        %v1771 = vadd.f32 %v1769, %v1770
        %v1772 = vrot.slane %v1771, 1
        %v1773 = vadd.f32 %v1771, %v1772
        %v1774 = vmul.f32 %v1706, 0.1
        %v1775 = vmul.f32 %v1709, 0.1
        %v1776 = vmul.f32 %v1714, 0.1
        %v1777 = vmul.f32 %v1717, 0.1
        %v1778 = vmul.f32 %v1722, 0.1
        %v1779 = vmul.f32 %v1725, 0.1
        %v1780 = vmul.f32 %v1730, 0.1
        %v1781 = vmul.f32 %v1733, 0.1
        %v1782 = vmul.f32 %v1738, 0.1
        %v1783 = vmul.f32 %v1741, 0.1
        %v1784 = vmul.f32 %v1746, 0.1
        %v1785 = vmul.f32 %v1749, 0.1
        %v1786 = vmul.f32 %v1754, 0.1
        %v1787 = vmul.f32 %v1757, 0.1
        %v1788 = vmul.f32 %v1762, 0.1
        %v1789 = vmul.f32 %v1765, 0.1
        %v1790 = vsub.f32 %v1583, %v1774
        %v1791 = vsub.f32 %v1584, %v1775
        %v1792 = vsub.f32 %v1585, %v1776
        %v1793 = vsub.f32 %v1586, %v1777
        %v1794 = vsub.f32 %v1587, %v1778
        %v1795 = vsub.f32 %v1588, %v1779
        %v1796 = vsub.f32 %v1589, %v1780
        %v1797 = vsub.f32 %v1590, %v1781
        %v1798 = vsub.f32 %v1591, %v1782
        %v1799 = vsub.f32 %v1592, %v1783
        %v1800 = vsub.f32 %v1593, %v1784
        %v1801 = vsub.f32 %v1594, %v1785
        %v1802 = vsub.f32 %v1595, %v1786
        %v1803 = vsub.f32 %v1596, %v1787
        %v1804 = vsub.f32 %v1597, %v1788
        %v1805 = vsub.f32 %v1598, %v1789
        %v1806 = vmul.f32 %v1773, 0.1
        %v1807 = vsub.f32 %v1600, %v1806
        %v1808 = vpack.c.bf16 %v1145, %v1145
        %v1809 = vpack.c.bf16 %v1791, %v1790
        %v1810 = vpack.c.bf16 %v1793, %v1792
        %v1811 = vpack.c.bf16 %v1795, %v1794
        %v1812 = vpack.c.bf16 %v1797, %v1796
        %v1813 = vpack.c.bf16 %v1799, %v1798
        %v1814 = vpack.c.bf16 %v1801, %v1800
        %v1815 = vpack.c.bf16 %v1803, %v1802
        %v1816 = vpack.c.bf16 %v1805, %v1804
        %v1818 = vlaneseq
        %v1819 = vshrl.u32 %v1818, 7
        %v1820 = vsub.s32 0, %v1819
        %v1821 = vrot.slane %v1807, %v1820
        %1823 = vmatprep.subr.bf16.mxu0 0
        %1824 = vmatpush1.bf16.msra.mxu0 %v1809
        %1825 = vmatprep.subr.bf16.mxu0 0
        %1826 = vmatpush1.bf16.msra.mxu0 %v1810
        %1827 = vmatprep.subr.bf16.mxu0 0
        %1828 = vmatpush1.bf16.msra.mxu0 %v1811
        %1829 = vmatprep.subr.bf16.mxu0 0
        %1830 = vmatpush1.bf16.msra.mxu0 %v1812
        %1831 = vmatprep.subr.bf16.mxu0 0
        %1832 = vmatpush1.bf16.msra.mxu0 %v1813
        %1833 = vmatprep.subr.bf16.mxu0 0
        %1834 = vmatpush1.bf16.msra.mxu0 %v1814
        %1835 = vmatprep.subr.bf16.mxu0 0
        %1836 = vmatpush1.bf16.msra.mxu0 %v1815
        %1837 = vmatprep.subr.bf16.mxu0 0
        %1838 = vmatpush1.bf16.msra.mxu0 %v1816
        %1839 = vmatprep.subr.bf16.mxu0 0
        %1840 = vmatpush1.bf16.msra.mxu0 0
        %1841 = vmatprep.subr.bf16.mxu0 0
        %1842 = vmatpush1.bf16.msra.mxu0 0
        %1843 = vmatprep.subr.bf16.mxu0 0
        %1844 = vmatpush1.bf16.msra.mxu0 0
        %1845 = vmatprep.subr.bf16.mxu0 0
        %1846 = vmatpush1.bf16.msra.mxu0 0
        %1847 = vmatprep.subr.bf16.mxu0 0
        %1848 = vmatpush1.bf16.msra.mxu0 0
        %1849 = vmatprep.subr.bf16.mxu0 0
        %1850 = vmatpush1.bf16.msra.mxu0 0
        %1851 = vmatprep.subr.bf16.mxu0 0
        %1852 = vmatpush1.bf16.msra.mxu0 0
        %1853 = vmatprep.subr.bf16.mxu0 0
        %1854 = vmatpush1.bf16.msra.mxu0 0
        %1855 = vmatprep.mubr.bf16.mxu0 0
        %1856 = vmatmul.mubr.bf16.gmra.mrb[0].mxu0 %v1808
        %v1857 = vpop.f32.mrb[0].mxu0
        %v1858 = vadd.f32 %v1821, %v1857
        %v1859 = vpop.f32.mrb[0].mxu0
        %v1860 = vpop.f32.mrb[0].mxu0
        %v1861 = vpop.f32.mrb[0].mxu0
        %1862 = vdwg.mxu0
        %v1863 = vsel %vm1325, %v1858, -1e+30
        %1864 = vmax.xlane.f32.xlu0 %v1863
        %v1865 = vpop.xlane.xlu0 %1864
        %v1866 = vsub.f32 %v1863, %v1865
        %v1867 = vmul.f32 %v1866, 1.442695
        %v1868 = vpow.pop %v1867
        %1869 = vadd.xlane.f32.xlu0 %v1868
        %v1870 = vpop.xlane.xlu0 %1869
        %v1871 = vrcp.pop %v1870
        %v1872 = vmul.f32 %v1868, %v1871
        %1873 = vset.pattern.permute.xlu0 0
        %1874 = vperm.xlu0 %1873, %v1327
        %v1875 = vpop.permute.xlu0 %1874
        %vm1876 = vcmp.eq.s32.totalorder %v1324, %v1875
        %v1877 = vsel %vm1876, 1, 0
        %v1878 = vcvt.s32.f32 %v1877
        %v1879 = vsub.f32 %v1872, %v1878
        %v1880 = vmul.f32 %v1879, 0.125
        %v1881 = vpack.c.bf16 %v1880, %v1880
        %1882 = vxpose.xlu0.c.b16.start [1/8] %v1808, 128
        %1883 = vxpose.xlu0.c.b16.cont [2/8] 0, 128
        %1884 = vxpose.xlu0.c.b16.cont [3/8] 0, 128
        %1885 = vxpose.xlu0.c.b16.cont [4/8] 0, 128
        %1886 = vxpose.xlu0.c.b16.cont [5/8] 0, 128
        %1887 = vxpose.xlu0.c.b16.cont [6/8] 0, 128
        %1888 = vxpose.xlu0.c.b16.cont [7/8] 0, 128
        %1889 = vxpose.xlu0.c.b16.end [8/8] 0, 128
        %v1890 = vpop.trf.xlu0
        %v1891 = vpop.trf.xlu0
        %v1892 = vpop.trf.xlu0
        %v1893 = vpop.trf.xlu0
        %v1894 = vpop.trf.xlu0
        %v1895 = vpop.trf.xlu0
        %v1896 = vpop.trf.xlu0
        %v1897 = vpop.trf.xlu0
        %v1899 = vsel %vm1435, %v1890, 0
        %v1902 = vsel %vm1435, %v1891, 0
        %v1905 = vsel %vm1435, %v1892, 0
        %v1908 = vsel %vm1435, %v1893, 0
        %v1911 = vsel %vm1435, %v1894, 0
        %v1914 = vsel %vm1435, %v1895, 0
        %v1917 = vsel %vm1435, %v1896, 0
        %v1920 = vsel %vm1435, %v1897, 0
        %v1923 = vsel %vm1460, %v1881, 0
        %1925 = vmatprep.subr.bf16.mxu0 0
        %1926 = vmatpush1.bf16.msra.mxu0 %v1923
        %1927 = vmatprep.subr.bf16.mxu0 0
        %1928 = vmatpush1.bf16.msra.mxu0 0
        %1929 = vmatprep.subr.bf16.mxu0 0
        %1930 = vmatpush1.bf16.msra.mxu0 0
        %1931 = vmatprep.subr.bf16.mxu0 0
        %1932 = vmatpush1.bf16.msra.mxu0 0
        %1933 = vmatprep.subr.bf16.mxu0 0
        %1934 = vmatpush1.bf16.msra.mxu0 0
        %1935 = vmatprep.subr.bf16.mxu0 0
        %1936 = vmatpush1.bf16.msra.mxu0 0
        %1937 = vmatprep.subr.bf16.mxu0 0
        %1938 = vmatpush1.bf16.msra.mxu0 0
        %1939 = vmatprep.subr.bf16.mxu0 0
        %1940 = vmatpush1.bf16.msra.mxu0 0
        %1941 = vmatprep.subr.bf16.mxu0 0
        %1942 = vmatpush1.bf16.msra.mxu0 0
        %1943 = vmatprep.subr.bf16.mxu0 0
        %1944 = vmatpush1.bf16.msra.mxu0 0
        %1945 = vmatprep.subr.bf16.mxu0 0
        %1946 = vmatpush1.bf16.msra.mxu0 0
        %1947 = vmatprep.subr.bf16.mxu0 0
        %1948 = vmatpush1.bf16.msra.mxu0 0
        %1949 = vmatprep.subr.bf16.mxu0 0
        %1950 = vmatpush1.bf16.msra.mxu0 0
        %1951 = vmatprep.subr.bf16.mxu0 0
        %1952 = vmatpush1.bf16.msra.mxu0 0
        %1953 = vmatprep.subr.bf16.mxu0 0
        %1954 = vmatpush1.bf16.msra.mxu0 0
        %1955 = vmatprep.subr.bf16.mxu0 0
        %1956 = vmatpush1.bf16.msra.mxu0 0
        %1957 = vmatprep.mubr.bf16.mxu0 0
        %1958 = vmatmul.mubr.bf16.gmra.mrb[0].mxu0 %v1899
        %v1959 = vpop.f32.mrb[0].mxu0
        %v1960 = vadd.f32 0.0, %v1959
        %v1961 = vpop.f32.mrb[0].mxu0
        %v1962 = vpop.f32.mrb[0].mxu0
        %v1963 = vadd.f32 0.0, %v1962
        %v1964 = vpop.f32.mrb[0].mxu0
        %1965 = vmatprep.mubr.bf16.mxu0 0
        %1966 = vmatmul.mubr.bf16.gmra.mrb[0].mxu0 %v1902
        %v1967 = vpop.f32.mrb[0].mxu0
        %v1968 = vadd.f32 0.0, %v1967
        %v1969 = vpop.f32.mrb[0].mxu0
        %v1970 = vpop.f32.mrb[0].mxu0
        %v1971 = vadd.f32 0.0, %v1970
        %v1972 = vpop.f32.mrb[0].mxu0
        %1973 = vmatprep.mubr.bf16.mxu0 0
        %1974 = vmatmul.mubr.bf16.gmra.mrb[0].mxu0 %v1905
        %v1975 = vpop.f32.mrb[0].mxu0
        %v1976 = vadd.f32 0.0, %v1975
        %v1977 = vpop.f32.mrb[0].mxu0
        %v1978 = vpop.f32.mrb[0].mxu0
        %v1979 = vadd.f32 0.0, %v1978
        %v1980 = vpop.f32.mrb[0].mxu0
        %1981 = vmatprep.mubr.bf16.mxu0 0
        %1982 = vmatmul.mubr.bf16.gmra.mrb[0].mxu0 %v1908
        %v1983 = vpop.f32.mrb[0].mxu0
        %v1984 = vadd.f32 0.0, %v1983
        %v1985 = vpop.f32.mrb[0].mxu0
        %v1986 = vpop.f32.mrb[0].mxu0
        %v1987 = vadd.f32 0.0, %v1986
        %v1988 = vpop.f32.mrb[0].mxu0
        %1989 = vmatprep.mubr.bf16.mxu0 0
        %1990 = vmatmul.mubr.bf16.gmra.mrb[0].mxu0 %v1911
        %v1991 = vpop.f32.mrb[0].mxu0
        %v1992 = vadd.f32 0.0, %v1991
        %v1993 = vpop.f32.mrb[0].mxu0
        %v1994 = vpop.f32.mrb[0].mxu0
        %v1995 = vadd.f32 0.0, %v1994
        %v1996 = vpop.f32.mrb[0].mxu0
        %1997 = vmatprep.mubr.bf16.mxu0 0
        %1998 = vmatmul.mubr.bf16.gmra.mrb[0].mxu0 %v1914
        %v1999 = vpop.f32.mrb[0].mxu0
        %v2000 = vadd.f32 0.0, %v1999
        %v2001 = vpop.f32.mrb[0].mxu0
        %v2002 = vpop.f32.mrb[0].mxu0
        %v2003 = vadd.f32 0.0, %v2002
        %v2004 = vpop.f32.mrb[0].mxu0
        %2005 = vmatprep.mubr.bf16.mxu0 0
        %2006 = vmatmul.mubr.bf16.gmra.mrb[0].mxu0 %v1917
        %v2007 = vpop.f32.mrb[0].mxu0
        %v2008 = vadd.f32 0.0, %v2007
        %v2009 = vpop.f32.mrb[0].mxu0
        %v2010 = vpop.f32.mrb[0].mxu0
        %v2011 = vadd.f32 0.0, %v2010
        %v2012 = vpop.f32.mrb[0].mxu0
        %2013 = vmatprep.mubr.bf16.mxu0 0
        %2014 = vmatmul.mubr.bf16.gmra.mrb[0].mxu0 %v1920
        %v2015 = vpop.f32.mrb[0].mxu0
        %v2016 = vadd.f32 0.0, %v2015
        %v2017 = vpop.f32.mrb[0].mxu0
        %v2018 = vpop.f32.mrb[0].mxu0
        %v2019 = vadd.f32 0.0, %v2018
        %v2020 = vpop.f32.mrb[0].mxu0
        %2021 = vdwg.mxu0
        %v2022 = vrot.slane %v1880, 4
        %v2023 = vadd.f32 %v1880, %v2022
        %v2024 = vrot.slane %v2023, 2
        %v2025 = vadd.f32 %v2023, %v2024
        %v2026 = vrot.slane %v2025, 1
        %v2027 = vadd.f32 %v2025, %v2026
        %v2028 = vmul.f32 %v1960, 0.1
        %v2029 = vmul.f32 %v1963, 0.1
        %v2030 = vmul.f32 %v1968, 0.1
        %v2031 = vmul.f32 %v1971, 0.1
        %v2032 = vmul.f32 %v1976, 0.1
        %v2033 = vmul.f32 %v1979, 0.1
        %v2034 = vmul.f32 %v1984, 0.1
        %v2035 = vmul.f32 %v1987, 0.1
        %v2036 = vmul.f32 %v1992, 0.1
        %v2037 = vmul.f32 %v1995, 0.1
        %v2038 = vmul.f32 %v2000, 0.1
        %v2039 = vmul.f32 %v2003, 0.1
        %v2040 = vmul.f32 %v2008, 0.1
        %v2041 = vmul.f32 %v2011, 0.1
        %v2042 = vmul.f32 %v2016, 0.1
        %v2043 = vmul.f32 %v2019, 0.1
        %v2044 = vsub.f32 %v1790, %v2028
        %v2045 = vsub.f32 %v1791, %v2029
        %v2046 = vsub.f32 %v1792, %v2030
        %v2047 = vsub.f32 %v1793, %v2031
        %v2048 = vsub.f32 %v1794, %v2032
        %v2049 = vsub.f32 %v1795, %v2033
        %v2050 = vsub.f32 %v1796, %v2034
        %v2051 = vsub.f32 %v1797, %v2035
        %v2052 = vsub.f32 %v1798, %v2036
        %v2053 = vsub.f32 %v1799, %v2037
        %v2054 = vsub.f32 %v1800, %v2038
        %v2055 = vsub.f32 %v1801, %v2039
        %v2056 = vsub.f32 %v1802, %v2040
        %v2057 = vsub.f32 %v1803, %v2041
        %v2058 = vsub.f32 %v1804, %v2042
        %v2059 = vsub.f32 %v1805, %v2043
        %v2060 = vmul.f32 %v2027, 0.1
        %v2061 = vsub.f32 %v1807, %v2060
        %v2062 = vld [vmem:[%s427] sm:$0xff]
        %v2063 = vpack.c.bf16 %v1322, %v1322
        %v2064 = vpack.c.bf16 %v2045, %v2044
        %v2065 = vpack.c.bf16 %v2047, %v2046
        %v2066 = vpack.c.bf16 %v2049, %v2048
        %v2067 = vpack.c.bf16 %v2051, %v2050
        %v2068 = vpack.c.bf16 %v2053, %v2052
        %v2069 = vpack.c.bf16 %v2055, %v2054
        %v2070 = vpack.c.bf16 %v2057, %v2056
        %v2071 = vpack.c.bf16 %v2059, %v2058
        %v2073 = vlaneseq
        %v2074 = vshrl.u32 %v2073, 7
        %v2075 = vsub.s32 0, %v2074
        %v2076 = vrot.slane %v2061, %v2075
        %2078 = vmatprep.subr.bf16.mxu0 0
        %2079 = vmatpush1.bf16.msra.mxu0 %v2064
        %2080 = vmatprep.subr.bf16.mxu0 0
        %2081 = vmatpush1.bf16.msra.mxu0 %v2065
        %2082 = vmatprep.subr.bf16.mxu0 0
        %2083 = vmatpush1.bf16.msra.mxu0 %v2066
        %2084 = vmatprep.subr.bf16.mxu0 0
        %2085 = vmatpush1.bf16.msra.mxu0 %v2067
        %2086 = vmatprep.subr.bf16.mxu0 0
        %2087 = vmatpush1.bf16.msra.mxu0 %v2068
        %2088 = vmatprep.subr.bf16.mxu0 0
        %2089 = vmatpush1.bf16.msra.mxu0 %v2069
        %2090 = vmatprep.subr.bf16.mxu0 0
        %2091 = vmatpush1.bf16.msra.mxu0 %v2070
        %2092 = vmatprep.subr.bf16.mxu0 0
        %2093 = vmatpush1.bf16.msra.mxu0 %v2071
        %2094 = vmatprep.subr.bf16.mxu0 0
        %2095 = vmatpush1.bf16.msra.mxu0 0
        %2096 = vmatprep.subr.bf16.mxu0 0
        %2097 = vmatpush1.bf16.msra.mxu0 0
        %2098 = vmatprep.subr.bf16.mxu0 0
        %2099 = vmatpush1.bf16.msra.mxu0 0
        %2100 = vmatprep.subr.bf16.mxu0 0
        %2101 = vmatpush1.bf16.msra.mxu0 0
        %2102 = vmatprep.subr.bf16.mxu0 0
        %2103 = vmatpush1.bf16.msra.mxu0 0
        %2104 = vmatprep.subr.bf16.mxu0 0
        %2105 = vmatpush1.bf16.msra.mxu0 0
        %2106 = vmatprep.subr.bf16.mxu0 0
        %2107 = vmatpush1.bf16.msra.mxu0 0
        %2108 = vmatprep.subr.bf16.mxu0 0
        %2109 = vmatpush1.bf16.msra.mxu0 0
        %2110 = vmatprep.mubr.bf16.mxu0 0
        %2111 = vmatmul.mubr.bf16.gmra.mrb[0].mxu0 %v2063
        %v2112 = vpop.f32.mrb[0].mxu0
        %v2113 = vadd.f32 %v2076, %v2112
        %v2114 = vpop.f32.mrb[0].mxu0
        %v2115 = vpop.f32.mrb[0].mxu0
        %v2116 = vpop.f32.mrb[0].mxu0
        %2117 = vdwg.mxu0
        %v2118 = vsel %vm1325, %v2113, -1e+30
        %2119 = vmax.xlane.f32.xlu0 %v2118
        %v2120 = vpop.xlane.xlu0 %2119
        %v2121 = vsub.f32 %v2118, %v2120
        %v2122 = vmul.f32 %v2121, 1.442695
        %v2123 = vpow.pop %v2122
        %2124 = vadd.xlane.f32.xlu0 %v2123
        %v2125 = vpop.xlane.xlu0 %2124
        %v2126 = vlog2.pop %v2125
        %v2127 = vmul.f32 %v2126, 0.6931472
        %v2128 = vsub.f32 %v2121, %v2127
        %2129 = vset.pattern.permute.xlu0 0
        %2130 = vperm.xlu0 %2129, %v2062
        %v2131 = vpop.permute.xlu0 %2130
        %vm2132 = vcmp.eq.s32.totalorder %v1324, %v2131
        %v2133 = vsel %vm2132, 1, 0
        %v2134 = vcvt.s32.f32 %v2133
        %v2135 = vmul.f32 %v2134, %v2128
        %2136 = vadd.xlane.f32.xlu0 %v2135
        %v2137 = vpop.xlane.xlu0 %2136
        %v2138 = vrot.slane %v2137, 4
        %v2139 = vadd.f32 %v2137, %v2138
        %v2140 = vrot.slane %v2139, 2
        %v2141 = vadd.f32 %v2139, %v2140
        %v2142 = vrot.slane %v2141, 1
        %v2143 = vadd.f32 %v2141, %v2142
        %s2144 = vtos %v2143
        %s2145 = ssub.f32 0.0, %s2144
        %s2146 = smul.f32 %s2145, 0.125
        %vm2147 = vcmp.eq.f32.partialorder %v2118, %v2120
        %v2148 = vsel %vm2147, %v1324, 128
        %v2149 = vand.u32 %v2148, 65535
        %v2150 = vshra.s32 %v2148, 16
        %v2151 = vcvt.s32.f32 %v2149
        %v2152 = vcvt.s32.f32 %v2150
        %2153 = vmin.xlane.f32.xlu0 %v2152
        %v2154 = vpop.xlane.xlu0 %2153
        %vm2155 = vcmp.eq.f32.partialorder %v2152, %v2154
        %v2156 = vsel %vm2155, %v2151, inf
        %2157 = vmin.xlane.f32.xlu0 %v2156
        %v2158 = vpop.xlane.xlu0 %2157
        %v2159 = vcvt.f32.s32 %v2158
        %v2160 = vcvt.f32.s32 %v2154
        %v2161 = vshll.u32 %v2160, 16
        %v2162 = vadd.s32 %v2161, %v2159
        %vm2163 = vcmp.eq.s32.totalorder %v2162, %v2062
        %v2164 = vsel %vm2163, 1, 0
        %v2165 = vcvt.s32.f32 %v2164
        %vm2166 = vcmask 7168
        %v2167 = vsel %vm2166, %v2165, 0.0
        %2168 = vadd.xlane.f32.xlu0 %v2167
        %v2169 = vpop.xlane.xlu0 %2168
        %v2170 = vrot.slane %v2169, 4
        %v2171 = vadd.f32 %v2169, %v2170
        %v2172 = vrot.slane %v2171, 2
        %v2173 = vadd.f32 %v2171, %v2172
        %v2174 = vrot.slane %v2173, 1
        %v2175 = vadd.f32 %v2173, %v2174
        %s2176 = vtos %v2175
        %2177 = vst [vmem:[%s396] sm:$0xff] %v2118
        %v2178 = vstv %s2146
        %2179 = vst [vmem:[%s431] sm:$0xff] %v2178
        %v2180 = vstv %s2176
        %2181 = vst [vmem:[%s435] sm:$0xff] %v2180
        %s2182 = sand.u32 %s221, 1
        %s2183 = scalar_lea.sflag [#allocation3], %s2182
        %s2184 = sand.u32 %s221, 1
        %s2185 = smul.addr %s2184, 8
        %s2186 = scalar_lea.vmem [#allocation2], %s2185
        %p2187 = scmp.lt.s32.totalorder %s25, 1
        %s2188 = scalar_select %p2187, %s25, 1
        %s2189 = smul.addr %s2188, 8
        %s2190 = scalar_lea.vmem %s9, %s2189
        %p2191 = scmp.lt.s32.totalorder %s25, 1
        %s2192 = scalar_select %p2191, %s25, 1
        %s2193 = smul.addr %s2192, 8
        %s2194 = scalar_lea.vmem %s10, %s2193
        // Predicated region
        $region53: #{meta_forward.1} parent=51 // pred_check
          %p2195 = pneg %p231
        $region54: #{meta_forward.1} parent=51 // pred_check_branch
          %2197 = sbr.rel (%p2195) target = $region56
        $region55: #{meta_forward.1} parent=51 // pred_region
          %s2199 = ssub.s32 128, 128
          %2200 = vsyncadd %s2183, %s2199
          %s2201 = smul.addr %s25, 128
          %s2202 = scalar_lea.hbm %s8, %s2201
          %s2204 = sshll.u32 %s2186, 4
          %s2205 = int_to_ptr.vmem [resolvable:$true] %s2204
          %2207 = dma.vmem_to_hbm [thread:$0]  %s2205, 128, %s2202, %s2183
        $region56: #{meta_forward.1} parent=51 // pred_fallthru
          _
        // Predicated region
        $region57: #{meta_forward.1} parent=51 // pred_check
          %p2208 = pneg %p257
        $region58: #{meta_forward.1} parent=51 // pred_check_branch
          %2210 = sbr.rel (%p2208) target = $region60
        $region59: #{meta_forward.1} parent=51 // pred_region
          _
        $region60: #{meta_forward.1} parent=51 // pred_fallthru
          _
        // Predicated region
        $region61: #{meta_forward.1} parent=51 // pred_check
          %p2211 = pneg %p283
        $region62: #{meta_forward.1} parent=51 // pred_check_branch
          %2213 = sbr.rel (%p2211) target = $region64
        $region63: #{meta_forward.1} parent=51 // pred_region
          _
        $region64: #{meta_forward.1} parent=51 // pred_fallthru
          _
      $region52: #{meta_forward.1} parent=5 // pred_fallthru
        _
      %p2214 = scmp.le.s32.totalorder 2, %s20
      // Predicated region
      $region65: #{meta_forward.1} parent=5 // pred_check
        %p2215 = pneg %p2214
      $region66: #{meta_forward.1} parent=5 // pred_check_branch
        %2217 = sbr.rel (%p2215) target = $region68
      $region67: #{meta_forward.1} parent=5 // pred_region
        %s2218 = ssub.s32 %s20, 2
        // Predicated region
        $region69: #{meta_forward.1} parent=67 // pred_check
          %p2219 = pneg %p237
        $region70: #{meta_forward.1} parent=67 // pred_check_branch
          %2221 = sbr.rel (%p2219) target = $region72
        $region71: #{meta_forward.1} parent=67 // pred_region
          %s2222 = sand.u32 %s222, 1
          %s2223 = scalar_lea.sflag [#allocation3], %s2222
          %s2224 = sand.u32 %s222, 1
          %s2225 = smul.addr %s2224, 8
          %s2226 = scalar_lea.vmem [#allocation2], %s2225
          %2227 = dma.done %s2223, 128
        $region72: #{meta_forward.1} parent=67 // pred_fallthru
          _
        // Predicated region
        $region73: #{meta_forward.1} parent=67 // pred_check
          %p2228 = pneg %p263
        $region74: #{meta_forward.1} parent=67 // pred_check_branch
          %2230 = sbr.rel (%p2228) target = $region76
        $region75: #{meta_forward.1} parent=67 // pred_region
          %p2231 = scmp.lt.s32.totalorder %s26, 1
          %s2232 = scalar_select %p2231, %s26, 1
          %s2233 = smul.addr %s2232, 8
          %s2234 = scalar_lea.vmem %s9, %s2233
        $region76: #{meta_forward.1} parent=67 // pred_fallthru
          _
        // Predicated region
        $region77: #{meta_forward.1} parent=67 // pred_check
          %p2235 = pneg %p289
        $region78: #{meta_forward.1} parent=67 // pred_check_branch
          %2237 = sbr.rel (%p2235) target = $region80
        $region79: #{meta_forward.1} parent=67 // pred_region
          %p2238 = scmp.lt.s32.totalorder %s26, 1
          %s2239 = scalar_select %p2238, %s26, 1
          %s2240 = smul.addr %s2239, 8
          %s2241 = scalar_lea.vmem %s10, %s2240
        $region80: #{meta_forward.1} parent=67 // pred_fallthru
          _
      $region68: #{meta_forward.1} parent=5 // pred_fallthru
        _
    $region6: #{meta_forward.1} parent=1 // loop_footer
      %s24 = sadd.s32 1, %s20
    $region7: #{meta_forward.1} parent=1 // loop_footer_branch
      %19 = sbr.rel target = $region3
    $region8: #{meta_forward.1} parent=1 // loop_exit
      _
    %2242 = vsyncpa [#allocation3], 1
    %s2243 = scalar_lea.sflag [#allocation3], 1
    %2244 = vsyncpa %s2243, 1

</llo_original>
